<compile_context>
chip_gen: v5e
topology: v5e:2x2
jax: 0.10.0
libtpu: 0.0.40
codegen_flags: <defaults>
</compile_context>

<pallas_src>
import math

import jax
import jax.numpy as jnp
from jax import lax
from jax.experimental import pallas as pl
from jax.experimental.pallas import tpu as pltpu

_EPS = 1e-4
_LOG_EPS = math.log(_EPS)
_LOG_ONE_MINUS_EPS = math.log(1.0 - _EPS)
_NUM_TYPES = 3     # heat, top-left, bottom-right
_NUM_STATS = 3     # pos_loss, neg_loss, num_pos
_OUT_LANES = 128   # lane-dense partial-stats output


def _make_focal_kernel(num_stacks):
    """Kernel over one row tile: all 3 heatmap types x all stacks.

    refs = (pred_0..pred_{S-1}, gt_heat, gt_tl, gt_br, out)
      pred_s block: (N, 3, row_tile, L)   -- channels 0..2 of stack s
      gt_t   block: (N, row_tile, L)
      out    block: (1, S*3, 128) partial [pos_loss, neg_loss, num_pos] rows
    """

    def kernel(*refs):
        pred_refs = refs[:num_stacks]
        gt_refs = refs[num_stacks:num_stacks + _NUM_TYPES]
        out_ref = refs[num_stacks + _NUM_TYPES]

        rows = num_stacks * _NUM_TYPES
        row_id = lax.broadcasted_iota(jnp.int32, (rows, _OUT_LANES), 0)
        lane_id = lax.broadcasted_iota(jnp.int32, (rows, _OUT_LANES), 1)
        acc = jnp.zeros((rows, _OUT_LANES), jnp.float32)

        for t in range(_NUM_TYPES):
            # gt block is loaded once per grid step and reused for all stacks.
            g = gt_refs[t][...].astype(jnp.float32)              # (N, Rt, L)
            pos = g == 1.0
            neg_w = jnp.square(jnp.square(1.0 - g))              # (1-gt)^4, 2 VPU muls
            npos = jnp.sum(pos.astype(jnp.float32), keepdims=True)[0]   # (1, 1)

            for s in range(num_stacks):
                x = pred_refs[s][:, t, :, :].astype(jnp.float32)  # (N, Rt, L)

                # clampSigmoid + its logs, sharing one exp and one log:
                #   log(sigmoid(x))     = min(x, 0) - log(1 + exp(-|x|))
                #   log(1 - sigmoid(x)) = -max(x, 0) - log(1 + exp(-|x|))
                # Clamping the (monotone) logs == log of the clamped sigmoid.
                e = jnp.exp(-jnp.abs(x))
                log1pe = jnp.log(1.0 + e)
                log_p = jnp.clip(jnp.minimum(x, 0.0) - log1pe,
                                 _LOG_EPS, _LOG_ONE_MINUS_EPS)
                log_1mp = jnp.clip(-jnp.maximum(x, 0.0) - log1pe,
                                   _LOG_EPS, _LOG_ONE_MINUS_EPS)
                inv = 1.0 / (1.0 + e)
                p = jnp.clip(jnp.where(x >= 0.0, inv, e * inv),
                             _EPS, 1.0 - _EPS)

                pos_term = jnp.where(pos, log_p * jnp.square(1.0 - p), 0.0)
                neg_term = jnp.where(pos, 0.0,
                                     log_1mp * jnp.square(p) * neg_w)

                ps = jnp.sum(pos_term, keepdims=True)[0]          # (1, 1)
                ns = jnp.sum(neg_term, keepdims=True)[0]          # (1, 1)

                r = s * _NUM_TYPES + t
                sel_r = row_id == r
                acc = acc + jnp.where(sel_r & (lane_id == 0), ps, 0.0)
                acc = acc + jnp.where(sel_r & (lane_id == 1), ns, 0.0)
                acc = acc + jnp.where(sel_r & (lane_id == 2), npos, 0.0)

        out_ref[0] = acc

    return kernel


def _pick_row_tile(rows, bytes_per_row, sublane_quantum, target_bytes=1 << 20):
    """Largest divisor of `rows` that is sublane aligned and keeps the biggest
    input block at/under `target_bytes` (falls back to the full extent)."""
    divisors = [d for d in range(1, rows + 1) if rows % d == 0]
    aligned = [d for d in divisors if d % sublane_quantum == 0]
    if not aligned:
        return rows                       # full-extent block (still legal)
    fitting = [d for d in aligned if d * bytes_per_row <= target_bytes]
    return max(fitting) if fitting else min(aligned)


def cornernet_loss(outs, targets, *, row_tile=None):
    """outs: list of (N, D, H, W) heatmap logits (D >= 3), one per stack.
    targets: tuple; targets[0]/[3]/[4] are (N, 1, H, W) ground-truth maps.
    Returns (loss of shape (1,), {}) matching the PyTorch module."""
    num_stacks = len(outs)
    N, D, H, W = outs[0].shape
    assert D >= _NUM_TYPES

    gts = (targets[0], targets[3], targets[4])

    # Copy-free lane-dense views (no channel slicing, stacking, or casting).
    if (H * W) % _OUT_LANES == 0:
        rows, lanes = (H * W) // _OUT_LANES, _OUT_LANES
    else:
        rows, lanes = H, W
    pred_views = [o.reshape(N, D, rows, lanes) for o in outs]
    gt_views = [g.reshape(N, rows, lanes) for g in gts]

    itemsize = max(jnp.dtype(a.dtype).itemsize for a in pred_views + gt_views)
    sublane_q = max(8, 32 // itemsize)        # 8 rows for f32, 16 for bf16
    # Largest input block per step = one stack's 3-channel slab.
    bytes_per_row = N * _NUM_TYPES * lanes * itemsize

    def _valid_tile(rt):
        return (isinstance(rt, int) and 1 <= rt <= rows and rows % rt == 0
                and (rt == rows or rt % sublane_q == 0))

    if row_tile is None or not _valid_tile(row_tile):
        row_tile = _pick_row_tile(rows, bytes_per_row, sublane_q)
    n_tiles = rows // row_tile

    pred_spec = pl.BlockSpec((N, _NUM_TYPES, row_tile, lanes),
                             lambda r: (0, 0, r, 0))
    gt_spec = pl.BlockSpec((N, row_tile, lanes), lambda r: (0, r, 0))
    out_spec = pl.BlockSpec((1, num_stacks * _NUM_TYPES, _OUT_LANES),
                            lambda r: (r, 0, 0))

    partials = pl.pallas_call(
        _make_focal_kernel(num_stacks),
        out_shape=jax.ShapeDtypeStruct(
            (n_tiles, num_stacks * _NUM_TYPES, _OUT_LANES), jnp.float32),
        grid=(n_tiles,),
        in_specs=[pred_spec] * num_stacks + [gt_spec] * _NUM_TYPES,
        out_specs=out_spec,
        compiler_params=pltpu.CompilerParams(
            dimension_semantics=("parallel",)),   # independent tiles -> v7x 2-core
    )(*pred_views, *gt_views)

    # Tiny scalar combine in plain JAX.
    stats = jnp.sum(partials, axis=0)                           # (S*3, 128)
    stats = stats[:, :_NUM_STATS].reshape(num_stacks, _NUM_TYPES, _NUM_STATS)
    pos_l, neg_l, npos = stats[..., 0], stats[..., 1], stats[..., 2]

    per_pred = jnp.where(npos == 0.0,
                         -neg_l,
                         -(pos_l + neg_l) / jnp.maximum(npos, 1.0))
    loss = jnp.sum(per_pred) / num_stacks       # sum over 3 types & all stacks
    return loss[None], {}


# ------------------------- pure-JAX reference ------------------------------
def _ref_focal(pred_list, gt):
    loss = 0.0
    for pred in pred_list:
        p = jnp.clip(jax.nn.sigmoid(pred), _EPS, 1.0 - _EPS)
        pos = gt == 1.0
        neg_w = (1.0 - gt) ** 4
        pos_loss = jnp.sum(jnp.where(pos, jnp.log(p) * (1.0 - p) ** 2, 0.0))
        neg_loss = jnp.sum(jnp.where(pos, 0.0, jnp.log(1.0 - p) * p ** 2 * neg_w))
        npos = jnp.sum(pos.astype(jnp.float32))
        loss = loss + jnp.where(npos == 0.0, -neg_loss,
                                -(pos_loss + neg_loss) / jnp.maximum(npos, 1.0))
    return loss


def _ref_loss(outs, targets):
    heats = [o[:, 0:1] for o in outs]
    tls = [o[:, 1:2] for o in outs]
    brs = [o[:, 2:3] for o in outs]
    total = (_ref_focal(heats, targets[0]) +
             _ref_focal(tls, targets[3]) +
             _ref_focal(brs, targets[4]))
    return total / len(outs)


if __name__ == "__main__":
    key = jax.random.PRNGKey(0)

    def run_case(k, N, D, H, W, num_stacks, row_tile=None, empty_tl=False):
        k_out, k_h, k_tl, k_br = jax.random.split(k, 4)
        outs = [jax.random.normal(kk, (N, D, H, W), dtype=jnp.float32)
                for kk in jax.random.split(k_out, num_stacks)]

        def make_gt(kk, allow_pos=True):
            u = jax.random.uniform(kk, (N, 1, H, W), dtype=jnp.float32)
            if allow_pos:
                # a few exact 1.0 "corner" positions, rest soft values in [0,0.9)
                return jnp.where(u > 0.95, 1.0, u * 0.9)
            return u * 0.9   # no positives -> exercises the num_pos==0 branch

        dummy = jnp.zeros((N, 1, H, W), jnp.float32)   # unused regression targets
        targets = (make_gt(k_h), dummy, dummy,
                   make_gt(k_tl, allow_pos=not empty_tl), make_gt(k_br))

        loss, aux = cornernet_loss(outs, targets, row_tile=row_tile)
        loss = jax.block_until_ready(loss)
        ref = _ref_loss(outs, targets)
        assert loss.shape == (1,)
        assert aux == {}
        assert jnp.allclose(loss[0], ref, rtol=1e-4, atol=1e-4), (loss, ref)

    k1, k2, k3, k4 = jax.random.split(key, 4)
    # Lane-dense path, single pipeline step.
    run_case(k1, N=2, D=3, H=16, W=16, num_stacks=2)
    # Lane-dense path with extra channels (D=4) and a forced 2-step row grid
    # to exercise the tiled partial-sum reduction + parallel grid axis.
    run_case(k2, N=2, D=4, H=64, W=32, num_stacks=2, row_tile=8)
    # Fallback path: H*W not a multiple of 128 (lanes = W = 20), 2 row tiles.
    run_case(k3, N=2, D=3, H=16, W=20, num_stacks=2, row_tile=8)
    # Single stack + one ground truth with zero positives (num_pos == 0 branch).
    run_case(k4, N=1, D=3, H=16, W=16, num_stacks=1, empty_tl=True)

    print("KERNEL_OK")
</pallas_src>

<mosaic_0001>
module attributes {stable_mosaic.version = 11 : i64} {
  func.func @kernel(%arg0: i32, %arg1: memref<2x3x2x128xf32, #tpu.memory_space<vmem>>, %arg2: memref<2x3x2x128xf32, #tpu.memory_space<vmem>>, %arg3: memref<2x2x128xf32, #tpu.memory_space<vmem>>, %arg4: memref<2x2x128xf32, #tpu.memory_space<vmem>>, %arg5: memref<2x2x128xf32, #tpu.memory_space<vmem>>, %arg6: memref<1x6x128xf32, #tpu.memory_space<vmem>>) attributes {dimension_semantics = [#tpu.dimension_semantics<parallel>], iteration_bounds = array<i64: 1>, scalar_prefetch = 0 : i64, scratch_operands = 0 : i64, tpu.core_type = #tpu.core_type<tc>, window_params = [{transform_indices = @transform_0, window_bounds = array<i64: 2, 3, 2, 128>}, {transform_indices = @transform_1, window_bounds = array<i64: 2, 3, 2, 128>}, {transform_indices = @transform_2, window_bounds = array<i64: 2, 2, 128>}, {transform_indices = @transform_3, window_bounds = array<i64: 2, 2, 128>}, {transform_indices = @transform_4, window_bounds = array<i64: 2, 2, 128>}, {transform_indices = @transform_5, window_bounds = array<i64: 1, 6, 128>}]} {
    %0 = tpu.iota {dimensions = array<i32: 0>} : vector<6x128xi32>
    %1 = tpu.iota {dimensions = array<i32: 1>} : vector<6x128xi32>
    %cst = arith.constant 0.000000e+00 : f32
    %2 = vector.broadcast %cst : f32 to vector<6x128xf32>
    %c0 = arith.constant 0 : index
    %c0_0 = arith.constant 0 : index
    %c0_1 = arith.constant 0 : index
    %3 = vector.load %arg3[%c0, %c0_0, %c0_1] : memref<2x2x128xf32, #tpu.memory_space<vmem>>, vector<2x2x128xf32>
    %cst_2 = arith.constant 1.000000e+00 : f32
    %4 = vector.broadcast %cst_2 : f32 to vector<2x2x128xf32>
    %5 = arith.cmpf oeq, %3, %4 : vector<2x2x128xf32>
    %cst_3 = arith.constant 1.000000e+00 : f32
    %6 = vector.broadcast %cst_3 : f32 to vector<2x2x128xf32>
    %7 = arith.subf %6, %3 : vector<2x2x128xf32>
    %8 = arith.mulf %7, %7 : vector<2x2x128xf32>
    %9 = arith.mulf %8, %8 : vector<2x2x128xf32>
    %10 = arith.extui %5 : vector<2x2x128xi1> to vector<2x2x128xi32>
    %11 = arith.sitofp %10 : vector<2x2x128xi32> to vector<2x2x128xf32>
    %12 = vector.shape_cast %11 : vector<2x2x128xf32> to vector<1x2x2x128xf32>
    %cst_4 = arith.constant dense<0.000000e+00> : vector<1xf32>
    %13 = vector.multi_reduction <add>, %12, %cst_4 [1, 2, 3] : vector<1x2x2x128xf32> to vector<1xf32>
    %14 = vector.shape_cast %13 : vector<1xf32> to vector<1x1x1x1xf32>
    %15 = vector.extract %14[0, 0, 0, 0] : f32 from vector<1x1x1x1xf32>
    %16 = vector.broadcast %15 : f32 to vector<1x1x1xf32>
    %17 = vector.shape_cast %16 : vector<1x1x1xf32> to vector<1x1xf32>
    %c0_5 = arith.constant 0 : index
    %c0_6 = arith.constant 0 : index
    %c0_7 = arith.constant 0 : index
    %c0_8 = arith.constant 0 : index
    %18 = vector.load %arg1[%c0_5, %c0_6, %c0_7, %c0_8] : memref<2x3x2x128xf32, #tpu.memory_space<vmem>>, vector<2x1x2x128xf32>
    %19 = vector.shape_cast %18 : vector<2x1x2x128xf32> to vector<2x2x128xf32>
    %20 = math.absf %19 : vector<2x2x128xf32>
    %cst_9 = arith.constant 0.000000e+00 : f32
    %21 = vector.broadcast %cst_9 : f32 to vector<2x2x128xf32>
    %22 = arith.subf %21, %20 : vector<2x2x128xf32>
    %23 = math.exp %22 : vector<2x2x128xf32>
    %cst_10 = arith.constant 1.000000e+00 : f32
    %24 = vector.broadcast %cst_10 : f32 to vector<2x2x128xf32>
    %25 = arith.addf %24, %23 : vector<2x2x128xf32>
    %26 = math.log %25 : vector<2x2x128xf32>
    %cst_11 = arith.constant 0.000000e+00 : f32
    %27 = vector.broadcast %cst_11 : f32 to vector<2x2x128xf32>
    %28 = arith.minimumf %19, %27 : vector<2x2x128xf32>
    %29 = arith.subf %28, %26 : vector<2x2x128xf32>
    %cst_12 = arith.constant -9.21034049 : f32
    %cst_13 = arith.constant -1.000050e-04 : f32
    %30 = vector.broadcast %cst_12 : f32 to vector<2x2x128xf32>
    %31 = arith.maximumf %30, %29 : vector<2x2x128xf32>
    %32 = vector.broadcast %cst_13 : f32 to vector<2x2x128xf32>
    %33 = arith.minimumf %32, %31 : vector<2x2x128xf32>
    %cst_14 = arith.constant 0.000000e+00 : f32
    %34 = vector.broadcast %cst_14 : f32 to vector<2x2x128xf32>
    %35 = arith.maximumf %19, %34 : vector<2x2x128xf32>
    %cst_15 = arith.constant 0.000000e+00 : f32
    %36 = vector.broadcast %cst_15 : f32 to vector<2x2x128xf32>
    %37 = arith.subf %36, %35 : vector<2x2x128xf32>
    %38 = arith.subf %37, %26 : vector<2x2x128xf32>
    %cst_16 = arith.constant -9.21034049 : f32
    %cst_17 = arith.constant -1.000050e-04 : f32
    %39 = vector.broadcast %cst_16 : f32 to vector<2x2x128xf32>
    %40 = arith.maximumf %39, %38 : vector<2x2x128xf32>
    %41 = vector.broadcast %cst_17 : f32 to vector<2x2x128xf32>
    %42 = arith.minimumf %41, %40 : vector<2x2x128xf32>
    %cst_18 = arith.constant 1.000000e+00 : f32
    %43 = vector.broadcast %cst_18 : f32 to vector<2x2x128xf32>
    %44 = arith.addf %43, %23 : vector<2x2x128xf32>
    %cst_19 = arith.constant 1.000000e+00 : f32
    %45 = vector.broadcast %cst_19 : f32 to vector<2x2x128xf32>
    %46 = arith.divf %45, %44 : vector<2x2x128xf32>
    %cst_20 = arith.constant 0.000000e+00 : f32
    %47 = vector.broadcast %cst_20 : f32 to vector<2x2x128xf32>
    %48 = arith.cmpf oge, %19, %47 : vector<2x2x128xf32>
    %49 = arith.mulf %23, %46 : vector<2x2x128xf32>
    %50 = arith.select %48, %46, %49 : vector<2x2x128xi1>, vector<2x2x128xf32>
    %cst_21 = arith.constant 9.99999974E-5 : f32
    %cst_22 = arith.constant 0.999899983 : f32
    %51 = vector.broadcast %cst_21 : f32 to vector<2x2x128xf32>
    %52 = arith.maximumf %51, %50 : vector<2x2x128xf32>
    %53 = vector.broadcast %cst_22 : f32 to vector<2x2x128xf32>
    %54 = arith.minimumf %53, %52 : vector<2x2x128xf32>
    %cst_23 = arith.constant 1.000000e+00 : f32
    %55 = vector.broadcast %cst_23 : f32 to vector<2x2x128xf32>
    %56 = arith.subf %55, %54 : vector<2x2x128xf32>
    %57 = arith.mulf %56, %56 : vector<2x2x128xf32>
    %58 = arith.mulf %33, %57 : vector<2x2x128xf32>
    %cst_24 = arith.constant 0.000000e+00 : f32
    %59 = vector.broadcast %cst_24 : f32 to vector<2x2x128xf32>
    %60 = arith.select %5, %58, %59 : vector<2x2x128xi1>, vector<2x2x128xf32>
    %61 = arith.mulf %54, %54 : vector<2x2x128xf32>
    %62 = arith.mulf %42, %61 : vector<2x2x128xf32>
    %63 = arith.mulf %62, %9 : vector<2x2x128xf32>
    %cst_25 = arith.constant 0.000000e+00 : f32
    %64 = vector.broadcast %cst_25 : f32 to vector<2x2x128xf32>
    %65 = arith.select %5, %64, %63 : vector<2x2x128xi1>, vector<2x2x128xf32>
    %66 = vector.shape_cast %60 : vector<2x2x128xf32> to vector<1x2x2x128xf32>
    %cst_26 = arith.constant dense<0.000000e+00> : vector<1xf32>
    %67 = vector.multi_reduction <add>, %66, %cst_26 [1, 2, 3] : vector<1x2x2x128xf32> to vector<1xf32>
    %68 = vector.shape_cast %67 : vector<1xf32> to vector<1x1x1x1xf32>
    %69 = vector.extract %68[0, 0, 0, 0] : f32 from vector<1x1x1x1xf32>
    %70 = vector.broadcast %69 : f32 to vector<1x1x1xf32>
    %71 = vector.shape_cast %70 : vector<1x1x1xf32> to vector<1x1xf32>
    %72 = vector.shape_cast %65 : vector<2x2x128xf32> to vector<1x2x2x128xf32>
    %cst_27 = arith.constant dense<0.000000e+00> : vector<1xf32>
    %73 = vector.multi_reduction <add>, %72, %cst_27 [1, 2, 3] : vector<1x2x2x128xf32> to vector<1xf32>
    %74 = vector.shape_cast %73 : vector<1xf32> to vector<1x1x1x1xf32>
    %75 = vector.extract %74[0, 0, 0, 0] : f32 from vector<1x1x1x1xf32>
    %76 = vector.broadcast %75 : f32 to vector<1x1x1xf32>
    %77 = vector.shape_cast %76 : vector<1x1x1xf32> to vector<1x1xf32>
    %c0_i32 = arith.constant 0 : i32
    %78 = vector.broadcast %c0_i32 : i32 to vector<6x128xi32>
    %79 = arith.cmpi eq, %0, %78 : vector<6x128xi32>
    %c0_i32_28 = arith.constant 0 : i32
    %80 = vector.broadcast %c0_i32_28 : i32 to vector<6x128xi32>
    %81 = arith.cmpi eq, %1, %80 : vector<6x128xi32>
    %82 = arith.andi %79, %81 : vector<6x128xi1>
    %cst_29 = arith.constant 0.000000e+00 : f32
    %83 = vector.shape_cast %71 : vector<1x1xf32> to vector<1x1xf32>
    %84 = vector.broadcast %83 : vector<1x1xf32> to vector<6x128xf32>
    %85 = vector.broadcast %cst_29 : f32 to vector<6x128xf32>
    %86 = arith.select %82, %84, %85 : vector<6x128xi1>, vector<6x128xf32>
    %87 = arith.addf %2, %86 : vector<6x128xf32>
    %c1_i32 = arith.constant 1 : i32
    %88 = vector.broadcast %c1_i32 : i32 to vector<6x128xi32>
    %89 = arith.cmpi eq, %1, %88 : vector<6x128xi32>
    %90 = arith.andi %79, %89 : vector<6x128xi1>
    %cst_30 = arith.constant 0.000000e+00 : f32
    %91 = vector.shape_cast %77 : vector<1x1xf32> to vector<1x1xf32>
    %92 = vector.broadcast %91 : vector<1x1xf32> to vector<6x128xf32>
    %93 = vector.broadcast %cst_30 : f32 to vector<6x128xf32>
    %94 = arith.select %90, %92, %93 : vector<6x128xi1>, vector<6x128xf32>
    %95 = arith.addf %87, %94 : vector<6x128xf32>
    %c2_i32 = arith.constant 2 : i32
    %96 = vector.broadcast %c2_i32 : i32 to vector<6x128xi32>
    %97 = arith.cmpi eq, %1, %96 : vector<6x128xi32>
    %98 = arith.andi %79, %97 : vector<6x128xi1>
    %cst_31 = arith.constant 0.000000e+00 : f32
    %99 = vector.shape_cast %17 : vector<1x1xf32> to vector<1x1xf32>
    %100 = vector.broadcast %99 : vector<1x1xf32> to vector<6x128xf32>
    %101 = vector.broadcast %cst_31 : f32 to vector<6x128xf32>
    %102 = arith.select %98, %100, %101 : vector<6x128xi1>, vector<6x128xf32>
    %103 = arith.addf %95, %102 : vector<6x128xf32>
    %c0_32 = arith.constant 0 : index
    %c0_33 = arith.constant 0 : index
    %c0_34 = arith.constant 0 : index
    %c0_35 = arith.constant 0 : index
    %104 = vector.load %arg2[%c0_32, %c0_33, %c0_34, %c0_35] : memref<2x3x2x128xf32, #tpu.memory_space<vmem>>, vector<2x1x2x128xf32>
    %105 = vector.shape_cast %104 : vector<2x1x2x128xf32> to vector<2x2x128xf32>
    %106 = math.absf %105 : vector<2x2x128xf32>
    %cst_36 = arith.constant 0.000000e+00 : f32
    %107 = vector.broadcast %cst_36 : f32 to vector<2x2x128xf32>
    %108 = arith.subf %107, %106 : vector<2x2x128xf32>
    %109 = math.exp %108 : vector<2x2x128xf32>
    %cst_37 = arith.constant 1.000000e+00 : f32
    %110 = vector.broadcast %cst_37 : f32 to vector<2x2x128xf32>
    %111 = arith.addf %110, %109 : vector<2x2x128xf32>
    %112 = math.log %111 : vector<2x2x128xf32>
    %cst_38 = arith.constant 0.000000e+00 : f32
    %113 = vector.broadcast %cst_38 : f32 to vector<2x2x128xf32>
    %114 = arith.minimumf %105, %113 : vector<2x2x128xf32>
    %115 = arith.subf %114, %112 : vector<2x2x128xf32>
    %cst_39 = arith.constant -9.21034049 : f32
    %cst_40 = arith.constant -1.000050e-04 : f32
    %116 = vector.broadcast %cst_39 : f32 to vector<2x2x128xf32>
    %117 = arith.maximumf %116, %115 : vector<2x2x128xf32>
    %118 = vector.broadcast %cst_40 : f32 to vector<2x2x128xf32>
    %119 = arith.minimumf %118, %117 : vector<2x2x128xf32>
    %cst_41 = arith.constant 0.000000e+00 : f32
    %120 = vector.broadcast %cst_41 : f32 to vector<2x2x128xf32>
    %121 = arith.maximumf %105, %120 : vector<2x2x128xf32>
    %cst_42 = arith.constant 0.000000e+00 : f32
    %122 = vector.broadcast %cst_42 : f32 to vector<2x2x128xf32>
    %123 = arith.subf %122, %121 : vector<2x2x128xf32>
    %124 = arith.subf %123, %112 : vector<2x2x128xf32>
    %cst_43 = arith.constant -9.21034049 : f32
    %cst_44 = arith.constant -1.000050e-04 : f32
    %125 = vector.broadcast %cst_43 : f32 to vector<2x2x128xf32>
    %126 = arith.maximumf %125, %124 : vector<2x2x128xf32>
    %127 = vector.broadcast %cst_44 : f32 to vector<2x2x128xf32>
    %128 = arith.minimumf %127, %126 : vector<2x2x128xf32>
    %cst_45 = arith.constant 1.000000e+00 : f32
    %129 = vector.broadcast %cst_45 : f32 to vector<2x2x128xf32>
    %130 = arith.addf %129, %109 : vector<2x2x128xf32>
    %cst_46 = arith.constant 1.000000e+00 : f32
    %131 = vector.broadcast %cst_46 : f32 to vector<2x2x128xf32>
    %132 = arith.divf %131, %130 : vector<2x2x128xf32>
    %cst_47 = arith.constant 0.000000e+00 : f32
    %133 = vector.broadcast %cst_47 : f32 to vector<2x2x128xf32>
    %134 = arith.cmpf oge, %105, %133 : vector<2x2x128xf32>
    %135 = arith.mulf %109, %132 : vector<2x2x128xf32>
    %136 = arith.select %134, %132, %135 : vector<2x2x128xi1>, vector<2x2x128xf32>
    %cst_48 = arith.constant 9.99999974E-5 : f32
    %cst_49 = arith.constant 0.999899983 : f32
    %137 = vector.broadcast %cst_48 : f32 to vector<2x2x128xf32>
    %138 = arith.maximumf %137, %136 : vector<2x2x128xf32>
    %139 = vector.broadcast %cst_49 : f32 to vector<2x2x128xf32>
    %140 = arith.minimumf %139, %138 : vector<2x2x128xf32>
    %cst_50 = arith.constant 1.000000e+00 : f32
    %141 = vector.broadcast %cst_50 : f32 to vector<2x2x128xf32>
    %142 = arith.subf %141, %140 : vector<2x2x128xf32>
    %143 = arith.mulf %142, %142 : vector<2x2x128xf32>
    %144 = arith.mulf %119, %143 : vector<2x2x128xf32>
    %cst_51 = arith.constant 0.000000e+00 : f32
    %145 = vector.broadcast %cst_51 : f32 to vector<2x2x128xf32>
    %146 = arith.select %5, %144, %145 : vector<2x2x128xi1>, vector<2x2x128xf32>
    %147 = arith.mulf %140, %140 : vector<2x2x128xf32>
    %148 = arith.mulf %128, %147 : vector<2x2x128xf32>
    %149 = arith.mulf %148, %9 : vector<2x2x128xf32>
    %cst_52 = arith.constant 0.000000e+00 : f32
    %150 = vector.broadcast %cst_52 : f32 to vector<2x2x128xf32>
    %151 = arith.select %5, %150, %149 : vector<2x2x128xi1>, vector<2x2x128xf32>
    %152 = vector.shape_cast %146 : vector<2x2x128xf32> to vector<1x2x2x128xf32>
    %cst_53 = arith.constant dense<0.000000e+00> : vector<1xf32>
    %153 = vector.multi_reduction <add>, %152, %cst_53 [1, 2, 3] : vector<1x2x2x128xf32> to vector<1xf32>
    %154 = vector.shape_cast %153 : vector<1xf32> to vector<1x1x1x1xf32>
    %155 = vector.extract %154[0, 0, 0, 0] : f32 from vector<1x1x1x1xf32>
    %156 = vector.broadcast %155 : f32 to vector<1x1x1xf32>
    %157 = vector.shape_cast %156 : vector<1x1x1xf32> to vector<1x1xf32>
    %158 = vector.shape_cast %151 : vector<2x2x128xf32> to vector<1x2x2x128xf32>
    %cst_54 = arith.constant dense<0.000000e+00> : vector<1xf32>
    %159 = vector.multi_reduction <add>, %158, %cst_54 [1, 2, 3] : vector<1x2x2x128xf32> to vector<1xf32>
    %160 = vector.shape_cast %159 : vector<1xf32> to vector<1x1x1x1xf32>
    %161 = vector.extract %160[0, 0, 0, 0] : f32 from vector<1x1x1x1xf32>
    %162 = vector.broadcast %161 : f32 to vector<1x1x1xf32>
    %163 = vector.shape_cast %162 : vector<1x1x1xf32> to vector<1x1xf32>
    %c3_i32 = arith.constant 3 : i32
    %164 = vector.broadcast %c3_i32 : i32 to vector<6x128xi32>
    %165 = arith.cmpi eq, %0, %164 : vector<6x128xi32>
    %c0_i32_55 = arith.constant 0 : i32
    %166 = vector.broadcast %c0_i32_55 : i32 to vector<6x128xi32>
    %167 = arith.cmpi eq, %1, %166 : vector<6x128xi32>
    %168 = arith.andi %165, %167 : vector<6x128xi1>
    %cst_56 = arith.constant 0.000000e+00 : f32
    %169 = vector.shape_cast %157 : vector<1x1xf32> to vector<1x1xf32>
    %170 = vector.broadcast %169 : vector<1x1xf32> to vector<6x128xf32>
    %171 = vector.broadcast %cst_56 : f32 to vector<6x128xf32>
    %172 = arith.select %168, %170, %171 : vector<6x128xi1>, vector<6x128xf32>
    %173 = arith.addf %103, %172 : vector<6x128xf32>
    %c1_i32_57 = arith.constant 1 : i32
    %174 = vector.broadcast %c1_i32_57 : i32 to vector<6x128xi32>
    %175 = arith.cmpi eq, %1, %174 : vector<6x128xi32>
    %176 = arith.andi %165, %175 : vector<6x128xi1>
    %cst_58 = arith.constant 0.000000e+00 : f32
    %177 = vector.shape_cast %163 : vector<1x1xf32> to vector<1x1xf32>
    %178 = vector.broadcast %177 : vector<1x1xf32> to vector<6x128xf32>
    %179 = vector.broadcast %cst_58 : f32 to vector<6x128xf32>
    %180 = arith.select %176, %178, %179 : vector<6x128xi1>, vector<6x128xf32>
    %181 = arith.addf %173, %180 : vector<6x128xf32>
    %c2_i32_59 = arith.constant 2 : i32
    %182 = vector.broadcast %c2_i32_59 : i32 to vector<6x128xi32>
    %183 = arith.cmpi eq, %1, %182 : vector<6x128xi32>
    %184 = arith.andi %165, %183 : vector<6x128xi1>
    %cst_60 = arith.constant 0.000000e+00 : f32
    %185 = vector.shape_cast %17 : vector<1x1xf32> to vector<1x1xf32>
    %186 = vector.broadcast %185 : vector<1x1xf32> to vector<6x128xf32>
    %187 = vector.broadcast %cst_60 : f32 to vector<6x128xf32>
    %188 = arith.select %184, %186, %187 : vector<6x128xi1>, vector<6x128xf32>
    %189 = arith.addf %181, %188 : vector<6x128xf32>
    %c0_61 = arith.constant 0 : index
    %c0_62 = arith.constant 0 : index
    %c0_63 = arith.constant 0 : index
    %190 = vector.load %arg4[%c0_61, %c0_62, %c0_63] : memref<2x2x128xf32, #tpu.memory_space<vmem>>, vector<2x2x128xf32>
    %cst_64 = arith.constant 1.000000e+00 : f32
    %191 = vector.broadcast %cst_64 : f32 to vector<2x2x128xf32>
    %192 = arith.cmpf oeq, %190, %191 : vector<2x2x128xf32>
    %cst_65 = arith.constant 1.000000e+00 : f32
    %193 = vector.broadcast %cst_65 : f32 to vector<2x2x128xf32>
    %194 = arith.subf %193, %190 : vector<2x2x128xf32>
    %195 = arith.mulf %194, %194 : vector<2x2x128xf32>
    %196 = arith.mulf %195, %195 : vector<2x2x128xf32>
    %197 = arith.extui %192 : vector<2x2x128xi1> to vector<2x2x128xi32>
    %198 = arith.sitofp %197 : vector<2x2x128xi32> to vector<2x2x128xf32>
    %199 = vector.shape_cast %198 : vector<2x2x128xf32> to vector<1x2x2x128xf32>
    %cst_66 = arith.constant dense<0.000000e+00> : vector<1xf32>
    %200 = vector.multi_reduction <add>, %199, %cst_66 [1, 2, 3] : vector<1x2x2x128xf32> to vector<1xf32>
    %201 = vector.shape_cast %200 : vector<1xf32> to vector<1x1x1x1xf32>
    %202 = vector.extract %201[0, 0, 0, 0] : f32 from vector<1x1x1x1xf32>
    %203 = vector.broadcast %202 : f32 to vector<1x1x1xf32>
    %204 = vector.shape_cast %203 : vector<1x1x1xf32> to vector<1x1xf32>
    %c0_67 = arith.constant 0 : index
    %c1 = arith.constant 1 : index
    %c0_68 = arith.constant 0 : index
    %c0_69 = arith.constant 0 : index
    %205 = vector.load %arg1[%c0_67, %c1, %c0_68, %c0_69] : memref<2x3x2x128xf32, #tpu.memory_space<vmem>>, vector<2x1x2x128xf32>
    %206 = vector.shape_cast %205 : vector<2x1x2x128xf32> to vector<2x2x128xf32>
    %207 = math.absf %206 : vector<2x2x128xf32>
    %cst_70 = arith.constant 0.000000e+00 : f32
    %208 = vector.broadcast %cst_70 : f32 to vector<2x2x128xf32>
    %209 = arith.subf %208, %207 : vector<2x2x128xf32>
    %210 = math.exp %209 : vector<2x2x128xf32>
    %cst_71 = arith.constant 1.000000e+00 : f32
    %211 = vector.broadcast %cst_71 : f32 to vector<2x2x128xf32>
    %212 = arith.addf %211, %210 : vector<2x2x128xf32>
    %213 = math.log %212 : vector<2x2x128xf32>
    %cst_72 = arith.constant 0.000000e+00 : f32
    %214 = vector.broadcast %cst_72 : f32 to vector<2x2x128xf32>
    %215 = arith.minimumf %206, %214 : vector<2x2x128xf32>
    %216 = arith.subf %215, %213 : vector<2x2x128xf32>
    %cst_73 = arith.constant -9.21034049 : f32
    %cst_74 = arith.constant -1.000050e-04 : f32
    %217 = vector.broadcast %cst_73 : f32 to vector<2x2x128xf32>
    %218 = arith.maximumf %217, %216 : vector<2x2x128xf32>
    %219 = vector.broadcast %cst_74 : f32 to vector<2x2x128xf32>
    %220 = arith.minimumf %219, %218 : vector<2x2x128xf32>
    %cst_75 = arith.constant 0.000000e+00 : f32
    %221 = vector.broadcast %cst_75 : f32 to vector<2x2x128xf32>
    %222 = arith.maximumf %206, %221 : vector<2x2x128xf32>
    %cst_76 = arith.constant 0.000000e+00 : f32
    %223 = vector.broadcast %cst_76 : f32 to vector<2x2x128xf32>
    %224 = arith.subf %223, %222 : vector<2x2x128xf32>
    %225 = arith.subf %224, %213 : vector<2x2x128xf32>
    %cst_77 = arith.constant -9.21034049 : f32
    %cst_78 = arith.constant -1.000050e-04 : f32
    %226 = vector.broadcast %cst_77 : f32 to vector<2x2x128xf32>
    %227 = arith.maximumf %226, %225 : vector<2x2x128xf32>
    %228 = vector.broadcast %cst_78 : f32 to vector<2x2x128xf32>
    %229 = arith.minimumf %228, %227 : vector<2x2x128xf32>
    %cst_79 = arith.constant 1.000000e+00 : f32
    %230 = vector.broadcast %cst_79 : f32 to vector<2x2x128xf32>
    %231 = arith.addf %230, %210 : vector<2x2x128xf32>
    %cst_80 = arith.constant 1.000000e+00 : f32
    %232 = vector.broadcast %cst_80 : f32 to vector<2x2x128xf32>
    %233 = arith.divf %232, %231 : vector<2x2x128xf32>
    %cst_81 = arith.constant 0.000000e+00 : f32
    %234 = vector.broadcast %cst_81 : f32 to vector<2x2x128xf32>
    %235 = arith.cmpf oge, %206, %234 : vector<2x2x128xf32>
    %236 = arith.mulf %210, %233 : vector<2x2x128xf32>
    %237 = arith.select %235, %233, %236 : vector<2x2x128xi1>, vector<2x2x128xf32>
    %cst_82 = arith.constant 9.99999974E-5 : f32
    %cst_83 = arith.constant 0.999899983 : f32
    %238 = vector.broadcast %cst_82 : f32 to vector<2x2x128xf32>
    %239 = arith.maximumf %238, %237 : vector<2x2x128xf32>
    %240 = vector.broadcast %cst_83 : f32 to vector<2x2x128xf32>
    %241 = arith.minimumf %240, %239 : vector<2x2x128xf32>
    %cst_84 = arith.constant 1.000000e+00 : f32
    %242 = vector.broadcast %cst_84 : f32 to vector<2x2x128xf32>
    %243 = arith.subf %242, %241 : vector<2x2x128xf32>
    %244 = arith.mulf %243, %243 : vector<2x2x128xf32>
    %245 = arith.mulf %220, %244 : vector<2x2x128xf32>
    %cst_85 = arith.constant 0.000000e+00 : f32
    %246 = vector.broadcast %cst_85 : f32 to vector<2x2x128xf32>
    %247 = arith.select %192, %245, %246 : vector<2x2x128xi1>, vector<2x2x128xf32>
    %248 = arith.mulf %241, %241 : vector<2x2x128xf32>
    %249 = arith.mulf %229, %248 : vector<2x2x128xf32>
    %250 = arith.mulf %249, %196 : vector<2x2x128xf32>
    %cst_86 = arith.constant 0.000000e+00 : f32
    %251 = vector.broadcast %cst_86 : f32 to vector<2x2x128xf32>
    %252 = arith.select %192, %251, %250 : vector<2x2x128xi1>, vector<2x2x128xf32>
    %253 = vector.shape_cast %247 : vector<2x2x128xf32> to vector<1x2x2x128xf32>
    %cst_87 = arith.constant dense<0.000000e+00> : vector<1xf32>
    %254 = vector.multi_reduction <add>, %253, %cst_87 [1, 2, 3] : vector<1x2x2x128xf32> to vector<1xf32>
    %255 = vector.shape_cast %254 : vector<1xf32> to vector<1x1x1x1xf32>
    %256 = vector.extract %255[0, 0, 0, 0] : f32 from vector<1x1x1x1xf32>
    %257 = vector.broadcast %256 : f32 to vector<1x1x1xf32>
    %258 = vector.shape_cast %257 : vector<1x1x1xf32> to vector<1x1xf32>
    %259 = vector.shape_cast %252 : vector<2x2x128xf32> to vector<1x2x2x128xf32>
    %cst_88 = arith.constant dense<0.000000e+00> : vector<1xf32>
    %260 = vector.multi_reduction <add>, %259, %cst_88 [1, 2, 3] : vector<1x2x2x128xf32> to vector<1xf32>
    %261 = vector.shape_cast %260 : vector<1xf32> to vector<1x1x1x1xf32>
    %262 = vector.extract %261[0, 0, 0, 0] : f32 from vector<1x1x1x1xf32>
    %263 = vector.broadcast %262 : f32 to vector<1x1x1xf32>
    %264 = vector.shape_cast %263 : vector<1x1x1xf32> to vector<1x1xf32>
    %c1_i32_89 = arith.constant 1 : i32
    %265 = vector.broadcast %c1_i32_89 : i32 to vector<6x128xi32>
    %266 = arith.cmpi eq, %0, %265 : vector<6x128xi32>
    %c0_i32_90 = arith.constant 0 : i32
    %267 = vector.broadcast %c0_i32_90 : i32 to vector<6x128xi32>
    %268 = arith.cmpi eq, %1, %267 : vector<6x128xi32>
    %269 = arith.andi %266, %268 : vector<6x128xi1>
    %cst_91 = arith.constant 0.000000e+00 : f32
    %270 = vector.shape_cast %258 : vector<1x1xf32> to vector<1x1xf32>
    %271 = vector.broadcast %270 : vector<1x1xf32> to vector<6x128xf32>
    %272 = vector.broadcast %cst_91 : f32 to vector<6x128xf32>
    %273 = arith.select %269, %271, %272 : vector<6x128xi1>, vector<6x128xf32>
    %274 = arith.addf %189, %273 : vector<6x128xf32>
    %c1_i32_92 = arith.constant 1 : i32
    %275 = vector.broadcast %c1_i32_92 : i32 to vector<6x128xi32>
    %276 = arith.cmpi eq, %1, %275 : vector<6x128xi32>
    %277 = arith.andi %266, %276 : vector<6x128xi1>
    %cst_93 = arith.constant 0.000000e+00 : f32
    %278 = vector.shape_cast %264 : vector<1x1xf32> to vector<1x1xf32>
    %279 = vector.broadcast %278 : vector<1x1xf32> to vector<6x128xf32>
    %280 = vector.broadcast %cst_93 : f32 to vector<6x128xf32>
    %281 = arith.select %277, %279, %280 : vector<6x128xi1>, vector<6x128xf32>
    %282 = arith.addf %274, %281 : vector<6x128xf32>
    %c2_i32_94 = arith.constant 2 : i32
    %283 = vector.broadcast %c2_i32_94 : i32 to vector<6x128xi32>
    %284 = arith.cmpi eq, %1, %283 : vector<6x128xi32>
    %285 = arith.andi %266, %284 : vector<6x128xi1>
    %cst_95 = arith.constant 0.000000e+00 : f32
    %286 = vector.shape_cast %204 : vector<1x1xf32> to vector<1x1xf32>
    %287 = vector.broadcast %286 : vector<1x1xf32> to vector<6x128xf32>
    %288 = vector.broadcast %cst_95 : f32 to vector<6x128xf32>
    %289 = arith.select %285, %287, %288 : vector<6x128xi1>, vector<6x128xf32>
    %290 = arith.addf %282, %289 : vector<6x128xf32>
    %c0_96 = arith.constant 0 : index
    %c1_97 = arith.constant 1 : index
    %c0_98 = arith.constant 0 : index
    %c0_99 = arith.constant 0 : index
    %291 = vector.load %arg2[%c0_96, %c1_97, %c0_98, %c0_99] : memref<2x3x2x128xf32, #tpu.memory_space<vmem>>, vector<2x1x2x128xf32>
    %292 = vector.shape_cast %291 : vector<2x1x2x128xf32> to vector<2x2x128xf32>
    %293 = math.absf %292 : vector<2x2x128xf32>
    %cst_100 = arith.constant 0.000000e+00 : f32
    %294 = vector.broadcast %cst_100 : f32 to vector<2x2x128xf32>
    %295 = arith.subf %294, %293 : vector<2x2x128xf32>
    %296 = math.exp %295 : vector<2x2x128xf32>
    %cst_101 = arith.constant 1.000000e+00 : f32
    %297 = vector.broadcast %cst_101 : f32 to vector<2x2x128xf32>
    %298 = arith.addf %297, %296 : vector<2x2x128xf32>
    %299 = math.log %298 : vector<2x2x128xf32>
    %cst_102 = arith.constant 0.000000e+00 : f32
    %300 = vector.broadcast %cst_102 : f32 to vector<2x2x128xf32>
    %301 = arith.minimumf %292, %300 : vector<2x2x128xf32>
    %302 = arith.subf %301, %299 : vector<2x2x128xf32>
    %cst_103 = arith.constant -9.21034049 : f32
    %cst_104 = arith.constant -1.000050e-04 : f32
    %303 = vector.broadcast %cst_103 : f32 to vector<2x2x128xf32>
    %304 = arith.maximumf %303, %302 : vector<2x2x128xf32>
    %305 = vector.broadcast %cst_104 : f32 to vector<2x2x128xf32>
    %306 = arith.minimumf %305, %304 : vector<2x2x128xf32>
    %cst_105 = arith.constant 0.000000e+00 : f32
    %307 = vector.broadcast %cst_105 : f32 to vector<2x2x128xf32>
    %308 = arith.maximumf %292, %307 : vector<2x2x128xf32>
    %cst_106 = arith.constant 0.000000e+00 : f32
    %309 = vector.broadcast %cst_106 : f32 to vector<2x2x128xf32>
    %310 = arith.subf %309, %308 : vector<2x2x128xf32>
    %311 = arith.subf %310, %299 : vector<2x2x128xf32>
    %cst_107 = arith.constant -9.21034049 : f32
    %cst_108 = arith.constant -1.000050e-04 : f32
    %312 = vector.broadcast %cst_107 : f32 to vector<2x2x128xf32>
    %313 = arith.maximumf %312, %311 : vector<2x2x128xf32>
    %314 = vector.broadcast %cst_108 : f32 to vector<2x2x128xf32>
    %315 = arith.minimumf %314, %313 : vector<2x2x128xf32>
    %cst_109 = arith.constant 1.000000e+00 : f32
    %316 = vector.broadcast %cst_109 : f32 to vector<2x2x128xf32>
    %317 = arith.addf %316, %296 : vector<2x2x128xf32>
    %cst_110 = arith.constant 1.000000e+00 : f32
    %318 = vector.broadcast %cst_110 : f32 to vector<2x2x128xf32>
    %319 = arith.divf %318, %317 : vector<2x2x128xf32>
    %cst_111 = arith.constant 0.000000e+00 : f32
    %320 = vector.broadcast %cst_111 : f32 to vector<2x2x128xf32>
    %321 = arith.cmpf oge, %292, %320 : vector<2x2x128xf32>
    %322 = arith.mulf %296, %319 : vector<2x2x128xf32>
    %323 = arith.select %321, %319, %322 : vector<2x2x128xi1>, vector<2x2x128xf32>
    %cst_112 = arith.constant 9.99999974E-5 : f32
    %cst_113 = arith.constant 0.999899983 : f32
    %324 = vector.broadcast %cst_112 : f32 to vector<2x2x128xf32>
    %325 = arith.maximumf %324, %323 : vector<2x2x128xf32>
    %326 = vector.broadcast %cst_113 : f32 to vector<2x2x128xf32>
    %327 = arith.minimumf %326, %325 : vector<2x2x128xf32>
    %cst_114 = arith.constant 1.000000e+00 : f32
    %328 = vector.broadcast %cst_114 : f32 to vector<2x2x128xf32>
    %329 = arith.subf %328, %327 : vector<2x2x128xf32>
    %330 = arith.mulf %329, %329 : vector<2x2x128xf32>
    %331 = arith.mulf %306, %330 : vector<2x2x128xf32>
    %cst_115 = arith.constant 0.000000e+00 : f32
    %332 = vector.broadcast %cst_115 : f32 to vector<2x2x128xf32>
    %333 = arith.select %192, %331, %332 : vector<2x2x128xi1>, vector<2x2x128xf32>
    %334 = arith.mulf %327, %327 : vector<2x2x128xf32>
    %335 = arith.mulf %315, %334 : vector<2x2x128xf32>
    %336 = arith.mulf %335, %196 : vector<2x2x128xf32>
    %cst_116 = arith.constant 0.000000e+00 : f32
    %337 = vector.broadcast %cst_116 : f32 to vector<2x2x128xf32>
    %338 = arith.select %192, %337, %336 : vector<2x2x128xi1>, vector<2x2x128xf32>
    %339 = vector.shape_cast %333 : vector<2x2x128xf32> to vector<1x2x2x128xf32>
    %cst_117 = arith.constant dense<0.000000e+00> : vector<1xf32>
    %340 = vector.multi_reduction <add>, %339, %cst_117 [1, 2, 3] : vector<1x2x2x128xf32> to vector<1xf32>
    %341 = vector.shape_cast %340 : vector<1xf32> to vector<1x1x1x1xf32>
    %342 = vector.extract %341[0, 0, 0, 0] : f32 from vector<1x1x1x1xf32>
    %343 = vector.broadcast %342 : f32 to vector<1x1x1xf32>
    %344 = vector.shape_cast %343 : vector<1x1x1xf32> to vector<1x1xf32>
    %345 = vector.shape_cast %338 : vector<2x2x128xf32> to vector<1x2x2x128xf32>
    %cst_118 = arith.constant dense<0.000000e+00> : vector<1xf32>
    %346 = vector.multi_reduction <add>, %345, %cst_118 [1, 2, 3] : vector<1x2x2x128xf32> to vector<1xf32>
    %347 = vector.shape_cast %346 : vector<1xf32> to vector<1x1x1x1xf32>
    %348 = vector.extract %347[0, 0, 0, 0] : f32 from vector<1x1x1x1xf32>
    %349 = vector.broadcast %348 : f32 to vector<1x1x1xf32>
    %350 = vector.shape_cast %349 : vector<1x1x1xf32> to vector<1x1xf32>
    %c4_i32 = arith.constant 4 : i32
    %351 = vector.broadcast %c4_i32 : i32 to vector<6x128xi32>
    %352 = arith.cmpi eq, %0, %351 : vector<6x128xi32>
    %c0_i32_119 = arith.constant 0 : i32
    %353 = vector.broadcast %c0_i32_119 : i32 to vector<6x128xi32>
    %354 = arith.cmpi eq, %1, %353 : vector<6x128xi32>
    %355 = arith.andi %352, %354 : vector<6x128xi1>
    %cst_120 = arith.constant 0.000000e+00 : f32
    %356 = vector.shape_cast %344 : vector<1x1xf32> to vector<1x1xf32>
    %357 = vector.broadcast %356 : vector<1x1xf32> to vector<6x128xf32>
    %358 = vector.broadcast %cst_120 : f32 to vector<6x128xf32>
    %359 = arith.select %355, %357, %358 : vector<6x128xi1>, vector<6x128xf32>
    %360 = arith.addf %290, %359 : vector<6x128xf32>
    %c1_i32_121 = arith.constant 1 : i32
    %361 = vector.broadcast %c1_i32_121 : i32 to vector<6x128xi32>
    %362 = arith.cmpi eq, %1, %361 : vector<6x128xi32>
    %363 = arith.andi %352, %362 : vector<6x128xi1>
    %cst_122 = arith.constant 0.000000e+00 : f32
    %364 = vector.shape_cast %350 : vector<1x1xf32> to vector<1x1xf32>
    %365 = vector.broadcast %364 : vector<1x1xf32> to vector<6x128xf32>
    %366 = vector.broadcast %cst_122 : f32 to vector<6x128xf32>
    %367 = arith.select %363, %365, %366 : vector<6x128xi1>, vector<6x128xf32>
    %368 = arith.addf %360, %367 : vector<6x128xf32>
    %c2_i32_123 = arith.constant 2 : i32
    %369 = vector.broadcast %c2_i32_123 : i32 to vector<6x128xi32>
    %370 = arith.cmpi eq, %1, %369 : vector<6x128xi32>
    %371 = arith.andi %352, %370 : vector<6x128xi1>
    %cst_124 = arith.constant 0.000000e+00 : f32
    %372 = vector.shape_cast %204 : vector<1x1xf32> to vector<1x1xf32>
    %373 = vector.broadcast %372 : vector<1x1xf32> to vector<6x128xf32>
    %374 = vector.broadcast %cst_124 : f32 to vector<6x128xf32>
    %375 = arith.select %371, %373, %374 : vector<6x128xi1>, vector<6x128xf32>
    %376 = arith.addf %368, %375 : vector<6x128xf32>
    %c0_125 = arith.constant 0 : index
    %c0_126 = arith.constant 0 : index
    %c0_127 = arith.constant 0 : index
    %377 = vector.load %arg5[%c0_125, %c0_126, %c0_127] : memref<2x2x128xf32, #tpu.memory_space<vmem>>, vector<2x2x128xf32>
    %cst_128 = arith.constant 1.000000e+00 : f32
    %378 = vector.broadcast %cst_128 : f32 to vector<2x2x128xf32>
    %379 = arith.cmpf oeq, %377, %378 : vector<2x2x128xf32>
    %cst_129 = arith.constant 1.000000e+00 : f32
    %380 = vector.broadcast %cst_129 : f32 to vector<2x2x128xf32>
    %381 = arith.subf %380, %377 : vector<2x2x128xf32>
    %382 = arith.mulf %381, %381 : vector<2x2x128xf32>
    %383 = arith.mulf %382, %382 : vector<2x2x128xf32>
    %384 = arith.extui %379 : vector<2x2x128xi1> to vector<2x2x128xi32>
    %385 = arith.sitofp %384 : vector<2x2x128xi32> to vector<2x2x128xf32>
    %386 = vector.shape_cast %385 : vector<2x2x128xf32> to vector<1x2x2x128xf32>
    %cst_130 = arith.constant dense<0.000000e+00> : vector<1xf32>
    %387 = vector.multi_reduction <add>, %386, %cst_130 [1, 2, 3] : vector<1x2x2x128xf32> to vector<1xf32>
    %388 = vector.shape_cast %387 : vector<1xf32> to vector<1x1x1x1xf32>
    %389 = vector.extract %388[0, 0, 0, 0] : f32 from vector<1x1x1x1xf32>
    %390 = vector.broadcast %389 : f32 to vector<1x1x1xf32>
    %391 = vector.shape_cast %390 : vector<1x1x1xf32> to vector<1x1xf32>
    %c0_131 = arith.constant 0 : index
    %c2 = arith.constant 2 : index
    %c0_132 = arith.constant 0 : index
    %c0_133 = arith.constant 0 : index
    %392 = vector.load %arg1[%c0_131, %c2, %c0_132, %c0_133] : memref<2x3x2x128xf32, #tpu.memory_space<vmem>>, vector<2x1x2x128xf32>
    %393 = vector.shape_cast %392 : vector<2x1x2x128xf32> to vector<2x2x128xf32>
    %394 = math.absf %393 : vector<2x2x128xf32>
    %cst_134 = arith.constant 0.000000e+00 : f32
    %395 = vector.broadcast %cst_134 : f32 to vector<2x2x128xf32>
    %396 = arith.subf %395, %394 : vector<2x2x128xf32>
    %397 = math.exp %396 : vector<2x2x128xf32>
    %cst_135 = arith.constant 1.000000e+00 : f32
    %398 = vector.broadcast %cst_135 : f32 to vector<2x2x128xf32>
    %399 = arith.addf %398, %397 : vector<2x2x128xf32>
    %400 = math.log %399 : vector<2x2x128xf32>
    %cst_136 = arith.constant 0.000000e+00 : f32
    %401 = vector.broadcast %cst_136 : f32 to vector<2x2x128xf32>
    %402 = arith.minimumf %393, %401 : vector<2x2x128xf32>
    %403 = arith.subf %402, %400 : vector<2x2x128xf32>
    %cst_137 = arith.constant -9.21034049 : f32
    %cst_138 = arith.constant -1.000050e-04 : f32
    %404 = vector.broadcast %cst_137 : f32 to vector<2x2x128xf32>
    %405 = arith.maximumf %404, %403 : vector<2x2x128xf32>
    %406 = vector.broadcast %cst_138 : f32 to vector<2x2x128xf32>
    %407 = arith.minimumf %406, %405 : vector<2x2x128xf32>
    %cst_139 = arith.constant 0.000000e+00 : f32
    %408 = vector.broadcast %cst_139 : f32 to vector<2x2x128xf32>
    %409 = arith.maximumf %393, %408 : vector<2x2x128xf32>
    %cst_140 = arith.constant 0.000000e+00 : f32
    %410 = vector.broadcast %cst_140 : f32 to vector<2x2x128xf32>
    %411 = arith.subf %410, %409 : vector<2x2x128xf32>
    %412 = arith.subf %411, %400 : vector<2x2x128xf32>
    %cst_141 = arith.constant -9.21034049 : f32
    %cst_142 = arith.constant -1.000050e-04 : f32
    %413 = vector.broadcast %cst_141 : f32 to vector<2x2x128xf32>
    %414 = arith.maximumf %413, %412 : vector<2x2x128xf32>
    %415 = vector.broadcast %cst_142 : f32 to vector<2x2x128xf32>
    %416 = arith.minimumf %415, %414 : vector<2x2x128xf32>
    %cst_143 = arith.constant 1.000000e+00 : f32
    %417 = vector.broadcast %cst_143 : f32 to vector<2x2x128xf32>
    %418 = arith.addf %417, %397 : vector<2x2x128xf32>
    %cst_144 = arith.constant 1.000000e+00 : f32
    %419 = vector.broadcast %cst_144 : f32 to vector<2x2x128xf32>
    %420 = arith.divf %419, %418 : vector<2x2x128xf32>
    %cst_145 = arith.constant 0.000000e+00 : f32
    %421 = vector.broadcast %cst_145 : f32 to vector<2x2x128xf32>
    %422 = arith.cmpf oge, %393, %421 : vector<2x2x128xf32>
    %423 = arith.mulf %397, %420 : vector<2x2x128xf32>
    %424 = arith.select %422, %420, %423 : vector<2x2x128xi1>, vector<2x2x128xf32>
    %cst_146 = arith.constant 9.99999974E-5 : f32
    %cst_147 = arith.constant 0.999899983 : f32
    %425 = vector.broadcast %cst_146 : f32 to vector<2x2x128xf32>
    %426 = arith.maximumf %425, %424 : vector<2x2x128xf32>
    %427 = vector.broadcast %cst_147 : f32 to vector<2x2x128xf32>
    %428 = arith.minimumf %427, %426 : vector<2x2x128xf32>
    %cst_148 = arith.constant 1.000000e+00 : f32
    %429 = vector.broadcast %cst_148 : f32 to vector<2x2x128xf32>
    %430 = arith.subf %429, %428 : vector<2x2x128xf32>
    %431 = arith.mulf %430, %430 : vector<2x2x128xf32>
    %432 = arith.mulf %407, %431 : vector<2x2x128xf32>
    %cst_149 = arith.constant 0.000000e+00 : f32
    %433 = vector.broadcast %cst_149 : f32 to vector<2x2x128xf32>
    %434 = arith.select %379, %432, %433 : vector<2x2x128xi1>, vector<2x2x128xf32>
    %435 = arith.mulf %428, %428 : vector<2x2x128xf32>
    %436 = arith.mulf %416, %435 : vector<2x2x128xf32>
    %437 = arith.mulf %436, %383 : vector<2x2x128xf32>
    %cst_150 = arith.constant 0.000000e+00 : f32
    %438 = vector.broadcast %cst_150 : f32 to vector<2x2x128xf32>
    %439 = arith.select %379, %438, %437 : vector<2x2x128xi1>, vector<2x2x128xf32>
    %440 = vector.shape_cast %434 : vector<2x2x128xf32> to vector<1x2x2x128xf32>
    %cst_151 = arith.constant dense<0.000000e+00> : vector<1xf32>
    %441 = vector.multi_reduction <add>, %440, %cst_151 [1, 2, 3] : vector<1x2x2x128xf32> to vector<1xf32>
    %442 = vector.shape_cast %441 : vector<1xf32> to vector<1x1x1x1xf32>
    %443 = vector.extract %442[0, 0, 0, 0] : f32 from vector<1x1x1x1xf32>
    %444 = vector.broadcast %443 : f32 to vector<1x1x1xf32>
    %445 = vector.shape_cast %444 : vector<1x1x1xf32> to vector<1x1xf32>
    %446 = vector.shape_cast %439 : vector<2x2x128xf32> to vector<1x2x2x128xf32>
    %cst_152 = arith.constant dense<0.000000e+00> : vector<1xf32>
    %447 = vector.multi_reduction <add>, %446, %cst_152 [1, 2, 3] : vector<1x2x2x128xf32> to vector<1xf32>
    %448 = vector.shape_cast %447 : vector<1xf32> to vector<1x1x1x1xf32>
    %449 = vector.extract %448[0, 0, 0, 0] : f32 from vector<1x1x1x1xf32>
    %450 = vector.broadcast %449 : f32 to vector<1x1x1xf32>
    %451 = vector.shape_cast %450 : vector<1x1x1xf32> to vector<1x1xf32>
    %c2_i32_153 = arith.constant 2 : i32
    %452 = vector.broadcast %c2_i32_153 : i32 to vector<6x128xi32>
    %453 = arith.cmpi eq, %0, %452 : vector<6x128xi32>
    %c0_i32_154 = arith.constant 0 : i32
    %454 = vector.broadcast %c0_i32_154 : i32 to vector<6x128xi32>
    %455 = arith.cmpi eq, %1, %454 : vector<6x128xi32>
    %456 = arith.andi %453, %455 : vector<6x128xi1>
    %cst_155 = arith.constant 0.000000e+00 : f32
    %457 = vector.shape_cast %445 : vector<1x1xf32> to vector<1x1xf32>
    %458 = vector.broadcast %457 : vector<1x1xf32> to vector<6x128xf32>
    %459 = vector.broadcast %cst_155 : f32 to vector<6x128xf32>
    %460 = arith.select %456, %458, %459 : vector<6x128xi1>, vector<6x128xf32>
    %461 = arith.addf %376, %460 : vector<6x128xf32>
    %c1_i32_156 = arith.constant 1 : i32
    %462 = vector.broadcast %c1_i32_156 : i32 to vector<6x128xi32>
    %463 = arith.cmpi eq, %1, %462 : vector<6x128xi32>
    %464 = arith.andi %453, %463 : vector<6x128xi1>
    %cst_157 = arith.constant 0.000000e+00 : f32
    %465 = vector.shape_cast %451 : vector<1x1xf32> to vector<1x1xf32>
    %466 = vector.broadcast %465 : vector<1x1xf32> to vector<6x128xf32>
    %467 = vector.broadcast %cst_157 : f32 to vector<6x128xf32>
    %468 = arith.select %464, %466, %467 : vector<6x128xi1>, vector<6x128xf32>
    %469 = arith.addf %461, %468 : vector<6x128xf32>
    %c2_i32_158 = arith.constant 2 : i32
    %470 = vector.broadcast %c2_i32_158 : i32 to vector<6x128xi32>
    %471 = arith.cmpi eq, %1, %470 : vector<6x128xi32>
    %472 = arith.andi %453, %471 : vector<6x128xi1>
    %cst_159 = arith.constant 0.000000e+00 : f32
    %473 = vector.shape_cast %391 : vector<1x1xf32> to vector<1x1xf32>
    %474 = vector.broadcast %473 : vector<1x1xf32> to vector<6x128xf32>
    %475 = vector.broadcast %cst_159 : f32 to vector<6x128xf32>
    %476 = arith.select %472, %474, %475 : vector<6x128xi1>, vector<6x128xf32>
    %477 = arith.addf %469, %476 : vector<6x128xf32>
    %c0_160 = arith.constant 0 : index
    %c2_161 = arith.constant 2 : index
    %c0_162 = arith.constant 0 : index
    %c0_163 = arith.constant 0 : index
    %478 = vector.load %arg2[%c0_160, %c2_161, %c0_162, %c0_163] : memref<2x3x2x128xf32, #tpu.memory_space<vmem>>, vector<2x1x2x128xf32>
    %479 = vector.shape_cast %478 : vector<2x1x2x128xf32> to vector<2x2x128xf32>
    %480 = math.absf %479 : vector<2x2x128xf32>
    %cst_164 = arith.constant 0.000000e+00 : f32
    %481 = vector.broadcast %cst_164 : f32 to vector<2x2x128xf32>
    %482 = arith.subf %481, %480 : vector<2x2x128xf32>
    %483 = math.exp %482 : vector<2x2x128xf32>
    %cst_165 = arith.constant 1.000000e+00 : f32
    %484 = vector.broadcast %cst_165 : f32 to vector<2x2x128xf32>
    %485 = arith.addf %484, %483 : vector<2x2x128xf32>
    %486 = math.log %485 : vector<2x2x128xf32>
    %cst_166 = arith.constant 0.000000e+00 : f32
    %487 = vector.broadcast %cst_166 : f32 to vector<2x2x128xf32>
    %488 = arith.minimumf %479, %487 : vector<2x2x128xf32>
    %489 = arith.subf %488, %486 : vector<2x2x128xf32>
    %cst_167 = arith.constant -9.21034049 : f32
    %cst_168 = arith.constant -1.000050e-04 : f32
    %490 = vector.broadcast %cst_167 : f32 to vector<2x2x128xf32>
    %491 = arith.maximumf %490, %489 : vector<2x2x128xf32>
    %492 = vector.broadcast %cst_168 : f32 to vector<2x2x128xf32>
    %493 = arith.minimumf %492, %491 : vector<2x2x128xf32>
    %cst_169 = arith.constant 0.000000e+00 : f32
    %494 = vector.broadcast %cst_169 : f32 to vector<2x2x128xf32>
    %495 = arith.maximumf %479, %494 : vector<2x2x128xf32>
    %cst_170 = arith.constant 0.000000e+00 : f32
    %496 = vector.broadcast %cst_170 : f32 to vector<2x2x128xf32>
    %497 = arith.subf %496, %495 : vector<2x2x128xf32>
    %498 = arith.subf %497, %486 : vector<2x2x128xf32>
    %cst_171 = arith.constant -9.21034049 : f32
    %cst_172 = arith.constant -1.000050e-04 : f32
    %499 = vector.broadcast %cst_171 : f32 to vector<2x2x128xf32>
    %500 = arith.maximumf %499, %498 : vector<2x2x128xf32>
    %501 = vector.broadcast %cst_172 : f32 to vector<2x2x128xf32>
    %502 = arith.minimumf %501, %500 : vector<2x2x128xf32>
    %cst_173 = arith.constant 1.000000e+00 : f32
    %503 = vector.broadcast %cst_173 : f32 to vector<2x2x128xf32>
    %504 = arith.addf %503, %483 : vector<2x2x128xf32>
    %cst_174 = arith.constant 1.000000e+00 : f32
    %505 = vector.broadcast %cst_174 : f32 to vector<2x2x128xf32>
    %506 = arith.divf %505, %504 : vector<2x2x128xf32>
    %cst_175 = arith.constant 0.000000e+00 : f32
    %507 = vector.broadcast %cst_175 : f32 to vector<2x2x128xf32>
    %508 = arith.cmpf oge, %479, %507 : vector<2x2x128xf32>
    %509 = arith.mulf %483, %506 : vector<2x2x128xf32>
    %510 = arith.select %508, %506, %509 : vector<2x2x128xi1>, vector<2x2x128xf32>
    %cst_176 = arith.constant 9.99999974E-5 : f32
    %cst_177 = arith.constant 0.999899983 : f32
    %511 = vector.broadcast %cst_176 : f32 to vector<2x2x128xf32>
    %512 = arith.maximumf %511, %510 : vector<2x2x128xf32>
    %513 = vector.broadcast %cst_177 : f32 to vector<2x2x128xf32>
    %514 = arith.minimumf %513, %512 : vector<2x2x128xf32>
    %cst_178 = arith.constant 1.000000e+00 : f32
    %515 = vector.broadcast %cst_178 : f32 to vector<2x2x128xf32>
    %516 = arith.subf %515, %514 : vector<2x2x128xf32>
    %517 = arith.mulf %516, %516 : vector<2x2x128xf32>
    %518 = arith.mulf %493, %517 : vector<2x2x128xf32>
    %cst_179 = arith.constant 0.000000e+00 : f32
    %519 = vector.broadcast %cst_179 : f32 to vector<2x2x128xf32>
    %520 = arith.select %379, %518, %519 : vector<2x2x128xi1>, vector<2x2x128xf32>
    %521 = arith.mulf %514, %514 : vector<2x2x128xf32>
    %522 = arith.mulf %502, %521 : vector<2x2x128xf32>
    %523 = arith.mulf %522, %383 : vector<2x2x128xf32>
    %cst_180 = arith.constant 0.000000e+00 : f32
    %524 = vector.broadcast %cst_180 : f32 to vector<2x2x128xf32>
    %525 = arith.select %379, %524, %523 : vector<2x2x128xi1>, vector<2x2x128xf32>
    %526 = vector.shape_cast %520 : vector<2x2x128xf32> to vector<1x2x2x128xf32>
    %cst_181 = arith.constant dense<0.000000e+00> : vector<1xf32>
    %527 = vector.multi_reduction <add>, %526, %cst_181 [1, 2, 3] : vector<1x2x2x128xf32> to vector<1xf32>
    %528 = vector.shape_cast %527 : vector<1xf32> to vector<1x1x1x1xf32>
    %529 = vector.extract %528[0, 0, 0, 0] : f32 from vector<1x1x1x1xf32>
    %530 = vector.broadcast %529 : f32 to vector<1x1x1xf32>
    %531 = vector.shape_cast %530 : vector<1x1x1xf32> to vector<1x1xf32>
    %532 = vector.shape_cast %525 : vector<2x2x128xf32> to vector<1x2x2x128xf32>
    %cst_182 = arith.constant dense<0.000000e+00> : vector<1xf32>
    %533 = vector.multi_reduction <add>, %532, %cst_182 [1, 2, 3] : vector<1x2x2x128xf32> to vector<1xf32>
    %534 = vector.shape_cast %533 : vector<1xf32> to vector<1x1x1x1xf32>
    %535 = vector.extract %534[0, 0, 0, 0] : f32 from vector<1x1x1x1xf32>
    %536 = vector.broadcast %535 : f32 to vector<1x1x1xf32>
    %537 = vector.shape_cast %536 : vector<1x1x1xf32> to vector<1x1xf32>
    %c5_i32 = arith.constant 5 : i32
    %538 = vector.broadcast %c5_i32 : i32 to vector<6x128xi32>
    %539 = arith.cmpi eq, %0, %538 : vector<6x128xi32>
    %c0_i32_183 = arith.constant 0 : i32
    %540 = vector.broadcast %c0_i32_183 : i32 to vector<6x128xi32>
    %541 = arith.cmpi eq, %1, %540 : vector<6x128xi32>
    %542 = arith.andi %539, %541 : vector<6x128xi1>
    %cst_184 = arith.constant 0.000000e+00 : f32
    %543 = vector.shape_cast %531 : vector<1x1xf32> to vector<1x1xf32>
    %544 = vector.broadcast %543 : vector<1x1xf32> to vector<6x128xf32>
    %545 = vector.broadcast %cst_184 : f32 to vector<6x128xf32>
    %546 = arith.select %542, %544, %545 : vector<6x128xi1>, vector<6x128xf32>
    %547 = arith.addf %477, %546 : vector<6x128xf32>
    %c1_i32_185 = arith.constant 1 : i32
    %548 = vector.broadcast %c1_i32_185 : i32 to vector<6x128xi32>
    %549 = arith.cmpi eq, %1, %548 : vector<6x128xi32>
    %550 = arith.andi %539, %549 : vector<6x128xi1>
    %cst_186 = arith.constant 0.000000e+00 : f32
    %551 = vector.shape_cast %537 : vector<1x1xf32> to vector<1x1xf32>
    %552 = vector.broadcast %551 : vector<1x1xf32> to vector<6x128xf32>
    %553 = vector.broadcast %cst_186 : f32 to vector<6x128xf32>
    %554 = arith.select %550, %552, %553 : vector<6x128xi1>, vector<6x128xf32>
    %555 = arith.addf %547, %554 : vector<6x128xf32>
    %c2_i32_187 = arith.constant 2 : i32
    %556 = vector.broadcast %c2_i32_187 : i32 to vector<6x128xi32>
    %557 = arith.cmpi eq, %1, %556 : vector<6x128xi32>
    %558 = arith.andi %539, %557 : vector<6x128xi1>
    %cst_188 = arith.constant 0.000000e+00 : f32
    %559 = vector.shape_cast %391 : vector<1x1xf32> to vector<1x1xf32>
    %560 = vector.broadcast %559 : vector<1x1xf32> to vector<6x128xf32>
    %561 = vector.broadcast %cst_188 : f32 to vector<6x128xf32>
    %562 = arith.select %558, %560, %561 : vector<6x128xi1>, vector<6x128xf32>
    %563 = arith.addf %555, %562 : vector<6x128xf32>
    %c0_189 = arith.constant 0 : index
    %c0_190 = arith.constant 0 : index
    %c0_191 = arith.constant 0 : index
    %564 = vector.load %arg6[%c0_189, %c0_190, %c0_191] : memref<1x6x128xf32, #tpu.memory_space<vmem>>, vector<1x6x128xf32>
    %565 = vector.shape_cast %564 : vector<1x6x128xf32> to vector<6x128xf32>
    %566 = vector.shape_cast %563 : vector<6x128xf32> to vector<1x6x128xf32>
    tpu.vector_store %arg6[%c0_189, %c0_190, %c0_191], %566 {strides = array<i32>} : memref<1x6x128xf32, #tpu.memory_space<vmem>>, vector<1x6x128xf32>,
    return
  }
  func.func @transform_0(%arg0: i32) -> (i32, i32, i32, i32) {
    %c0_i32 = arith.constant 0 : i32
    %c0_i32_0 = arith.constant 0 : i32
    %c0_i32_1 = arith.constant 0 : i32
    %c0_i32_2 = arith.constant 0 : i32
    return %c0_i32, %c0_i32_0, %arg0, %c0_i32_1 : i32, i32, i32, i32
  }
  func.func @transform_1(%arg0: i32) -> (i32, i32, i32, i32) {
    %c0_i32 = arith.constant 0 : i32
    %c0_i32_0 = arith.constant 0 : i32
    %c0_i32_1 = arith.constant 0 : i32
    %c0_i32_2 = arith.constant 0 : i32
    return %c0_i32, %c0_i32_0, %arg0, %c0_i32_1 : i32, i32, i32, i32
  }
  func.func @transform_2(%arg0: i32) -> (i32, i32, i32) {
    %c0_i32 = arith.constant 0 : i32
    %c0_i32_0 = arith.constant 0 : i32
    %c0_i32_1 = arith.constant 0 : i32
    return %c0_i32, %arg0, %c0_i32_0 : i32, i32, i32
  }
  func.func @transform_3(%arg0: i32) -> (i32, i32, i32) {
    %c0_i32 = arith.constant 0 : i32
    %c0_i32_0 = arith.constant 0 : i32
    %c0_i32_1 = arith.constant 0 : i32
    return %c0_i32, %arg0, %c0_i32_0 : i32, i32, i32
  }
  func.func @transform_4(%arg0: i32) -> (i32, i32, i32) {
    %c0_i32 = arith.constant 0 : i32
    %c0_i32_0 = arith.constant 0 : i32
    %c0_i32_1 = arith.constant 0 : i32
    return %c0_i32, %arg0, %c0_i32_0 : i32, i32, i32
  }
  func.func @transform_5(%arg0: i32) -> (i32, i32, i32) {
    %c0_i32 = arith.constant 0 : i32
    %c0_i32_0 = arith.constant 0 : i32
    %c0_i32_1 = arith.constant 0 : i32
    return %arg0, %c0_i32, %c0_i32_0 : i32, i32, i32
  }
}

</mosaic_0001>

<llo_original>
// kernel: tpu_custom_call.1
$region0: #{tpu_custom_call.1}
  #allocation0 [shape = 'u32[]', space=smem, size = 0x4, offset = 0x4, fixed_abs, tag = 'smem constant byte address 0x4 - core index']
  #allocation1 [shape = 'u32[72,128]{1,0:T(1,128)}', space=vmem, size = 0x9000, scoped, tag = 'internal scratch']
  %s0 = inlined_call_operand.hbm [shape: f32[2,3,2,128], index: 0, kind: input, shape index: {}]
  %s1 = inlined_call_operand.hbm [shape: f32[2,3,2,128], index: 1, kind: input, shape index: {}]
  %s2 = inlined_call_operand.hbm [shape: f32[2,2,128], index: 2, kind: input, shape index: {}]
  %s3 = inlined_call_operand.hbm [shape: f32[2,2,128], index: 3, kind: input, shape index: {}]
  %s4 = inlined_call_operand.hbm [shape: f32[2,2,128], index: 4, kind: input, shape index: {}]
  %s5 = inlined_call_operand.vmem [shape: f32[1,6,128], index: 5, kind: output, shape index: {}]
  %s6 = sld [smem:[#allocation0]]
  $region50: #{tpu_custom_call.1} parent=0
    _
  %s8 = ssub.s32 1, %s6
  %s9 = scalar_select 0, %s8, %s6
  $region1: #{tpu_custom_call.1} parent=0
    #allocation2 [shape = 'u8[6144]{0}', space=vmem, size = 0x1800, scoped, tag = 'input window, operand 0, single buffered']
    #allocation3 [shape = 's32[1]{0}', space=sflag, size = 0x4, scoped, tag = 'scoped memory for tpu_custom_call.1']
    #allocation4 [shape = 'u8[6144]{0}', space=vmem, size = 0x1800, scoped, tag = 'input window, operand 1, single buffered']
    #allocation5 [shape = 's32[1]{0}', space=sflag, size = 0x4, scoped, tag = 'scoped memory for tpu_custom_call.1']
    #allocation6 [shape = 'u8[2048]{0}', space=vmem, size = 0x800, scoped, tag = 'input window, operand 2, single buffered']
    #allocation7 [shape = 'u8[2048]{0}', space=vmem, size = 0x800, scoped, tag = 'input window, operand 3, single buffered']
    #allocation8 [shape = 's32[1]{0}', space=sflag, size = 0x4, scoped, tag = 'scoped memory for tpu_custom_call.1']
    #allocation9 [shape = 'u8[2048]{0}', space=vmem, size = 0x800, scoped, tag = 'input window, operand 4, single buffered']
    %10 = vsyncpa [#allocation3], 0
    %11 = vsyncpa [#allocation5], 0
    %12 = vsyncpa [#allocation8], 0
    // Predicated region
    $region2: #{tpu_custom_call.1} parent=1 // pred_check
      _
    $region3: #{tpu_custom_call.1} parent=1 // pred_check_branch
      %14 = sbr.rel (0) target = $region5
    $region4: #{tpu_custom_call.1} parent=1 // pred_region
      %16 = vsyncadd [#allocation3], 0
      %s17 = sshll.u32 %s0, 4
      %s18 = int_to_ptr.hbm [resolvable:$true] %s17
      %s19 = sshll.u32 [#allocation2], 4
      %s20 = int_to_ptr.vmem [resolvable:$true] %s19
      %25 = dma.hbm_to_vmem [thread:$0]  %s18, 192, %s20, [#allocation3], 32, 32, 2
    $region5: #{tpu_custom_call.1} parent=1 // pred_fallthru
      _
    // Predicated region
    $region6: #{tpu_custom_call.1} parent=1 // pred_check
      _
    $region7: #{tpu_custom_call.1} parent=1 // pred_check_branch
      %27 = sbr.rel (0) target = $region9
    $region8: #{tpu_custom_call.1} parent=1 // pred_region
      %29 = vsyncadd [#allocation5], 0
      %s30 = sshll.u32 %s1, 4
      %s31 = int_to_ptr.hbm [resolvable:$true] %s30
      %s32 = sshll.u32 [#allocation4], 4
      %s33 = int_to_ptr.vmem [resolvable:$true] %s32
      %38 = dma.hbm_to_vmem [thread:$0]  %s31, 192, %s33, [#allocation5], 32, 32, 2
    $region9: #{tpu_custom_call.1} parent=1 // pred_fallthru
      _
    // Predicated region
    $region10: #{tpu_custom_call.1} parent=1 // pred_check
      _
    $region11: #{tpu_custom_call.1} parent=1 // pred_check_branch
      %40 = sbr.rel (0) target = $region13
    $region12: #{tpu_custom_call.1} parent=1 // pred_region
      %42 = vsyncadd [#allocation5], 0
      %s43 = sshll.u32 %s2, 4
      %s44 = int_to_ptr.hbm [resolvable:$true] %s43
      %s45 = sshll.u32 [#allocation6], 4
      %s46 = int_to_ptr.vmem [resolvable:$true] %s45
      %51 = dma.hbm_to_vmem [thread:$0]  %s44, 64, %s46, [#allocation5], 32, 32, 2
    $region13: #{tpu_custom_call.1} parent=1 // pred_fallthru
      _
    // Predicated region
    $region14: #{tpu_custom_call.1} parent=1 // pred_check
      _
    $region15: #{tpu_custom_call.1} parent=1 // pred_check_branch
      %53 = sbr.rel (0) target = $region17
    $region16: #{tpu_custom_call.1} parent=1 // pred_region
      %55 = vsyncadd [#allocation8], 0
      %s56 = sshll.u32 %s3, 4
      %s57 = int_to_ptr.hbm [resolvable:$true] %s56
      %s58 = sshll.u32 [#allocation7], 4
      %s59 = int_to_ptr.vmem [resolvable:$true] %s58
      %64 = dma.hbm_to_vmem [thread:$0]  %s57, 64, %s59, [#allocation8], 32, 32, 2
    $region17: #{tpu_custom_call.1} parent=1 // pred_fallthru
      _
    // Predicated region
    $region18: #{tpu_custom_call.1} parent=1 // pred_check
      _
    $region19: #{tpu_custom_call.1} parent=1 // pred_check_branch
      %66 = sbr.rel (0) target = $region21
    $region20: #{tpu_custom_call.1} parent=1 // pred_region
      %68 = vsyncadd [#allocation8], 0
      %s69 = sshll.u32 %s4, 4
      %s70 = int_to_ptr.hbm [resolvable:$true] %s69
      %s71 = sshll.u32 [#allocation9], 4
      %s72 = int_to_ptr.vmem [resolvable:$true] %s71
      %77 = dma.hbm_to_vmem [thread:$0]  %s70, 64, %s72, [#allocation8], 32, 32, 2
    $region21: #{tpu_custom_call.1} parent=1 // pred_fallthru
      _
    // Predicated region
    $region22: #{tpu_custom_call.1} parent=1 // pred_check
      _
    $region23: #{tpu_custom_call.1} parent=1 // pred_check_branch
      %79 = sbr.rel (0) target = $region25
    $region24: #{tpu_custom_call.1} parent=1 // pred_region
      %81 = dma.done [#allocation3], 192
    $region25: #{tpu_custom_call.1} parent=1 // pred_fallthru
      _
    // Predicated region
    $region26: #{tpu_custom_call.1} parent=1 // pred_check
      _
    $region27: #{tpu_custom_call.1} parent=1 // pred_check_branch
      %83 = sbr.rel (0) target = $region29
    $region28: #{tpu_custom_call.1} parent=1 // pred_region
      %85 = dma.done [#allocation5], 192
    $region29: #{tpu_custom_call.1} parent=1 // pred_fallthru
      _
    // Predicated region
    $region30: #{tpu_custom_call.1} parent=1 // pred_check
      _
    $region31: #{tpu_custom_call.1} parent=1 // pred_check_branch
      %87 = sbr.rel (0) target = $region33
    $region32: #{tpu_custom_call.1} parent=1 // pred_region
      %89 = dma.done [#allocation5], 64
    $region33: #{tpu_custom_call.1} parent=1 // pred_fallthru
      _
    // Predicated region
    $region34: #{tpu_custom_call.1} parent=1 // pred_check
      _
    $region35: #{tpu_custom_call.1} parent=1 // pred_check_branch
      %91 = sbr.rel (0) target = $region37
    $region36: #{tpu_custom_call.1} parent=1 // pred_region
      %93 = dma.done [#allocation8], 64
    $region37: #{tpu_custom_call.1} parent=1 // pred_fallthru
      _
    // Predicated region
    $region38: #{tpu_custom_call.1} parent=1 // pred_check
      _
    $region39: #{tpu_custom_call.1} parent=1 // pred_check_branch
      %95 = sbr.rel (0) target = $region41
    $region40: #{tpu_custom_call.1} parent=1 // pred_region
      %97 = dma.done [#allocation8], 64
    $region41: #{tpu_custom_call.1} parent=1 // pred_fallthru
      _
    %v98 = vlaneseq
    %v99 = vshrl.u32 %v98, 7
    %v100 = vlaneseq
    %v101 = vand.u32 %v100, 127
    %v102 = vld [vmem:[#allocation6] sm:$0x3]
    %v103 = vld [vmem:[#allocation6 + $0x2] sm:$0x3]
    %vm104 = vcmp.eq.f32.partialorder %v102, 1.0
    %vm105 = vcmp.eq.f32.partialorder %v103, 1.0
    %v106 = vsub.f32 1.0, %v102
    %v107 = vsub.f32 1.0, %v103
    %v108 = vmul.f32 %v106, %v106
    %v109 = vmul.f32 %v107, %v107
    %v110 = vmul.f32 %v108, %v108
    %v111 = vmul.f32 %v109, %v109
    %v112 = vsel %vm104, 1, 0
    %v113 = vsel %vm105, 1, 0
    %v114 = vcvt.s32.f32 %v112
    %v115 = vcvt.s32.f32 %v113
    %vm116 = vcmask 1041408
    %v117 = vsel %vm116, %v114, 0.0
    %v118 = vsel %vm116, %v115, 0.0
    %v119 = vadd.f32 %v117, %v118
    %120 = vadd.xlane.f32.xlu0 %v119
    %v121 = vpop.xlane.xlu0 %120
    %v122 = vrot.slane %v121, 4
    %v123 = vadd.f32 %v121, %v122
    %v124 = vrot.slane %v123, 2
    %v125 = vadd.f32 %v123, %v124
    %v126 = vrot.slane %v125, 1
    %v127 = vadd.f32 %v125, %v126
    %s128 = vtos %v127
    %v129 = vld [vmem:[#allocation2] sm:$0x3]
    %v130 = vld [vmem:[#allocation2 + $0x6] sm:$0x3]
    %v131 = vand.u32 2147483647, %v129
    %v132 = vand.u32 2147483647, %v130
    %v133 = vsub.f32 0.0, %v131
    %v134 = vsub.f32 0.0, %v132
    %v135 = vmul.f32 %v133, 1.442695
    %v136 = vpow.pop %v135
    %v137 = vmul.f32 %v134, 1.442695
    %v138 = vpow.pop %v137
    %v139 = vadd.f32 %v136, 1.0
    %v140 = vadd.f32 %v138, 1.0
    %v141 = vlog2.pop %v139
    %v142 = vmul.f32 %v141, 0.6931472
    %v143 = vlog2.pop %v140
    %v144 = vmul.f32 %v143, 0.6931472
    %v145 = vmin.f32 %v129, 0.0
    %v146 = vmin.f32 %v130, 0.0
    %v147 = vsub.f32 %v145, %v142
    %v148 = vsub.f32 %v146, %v144
    %v149 = vmax.f32 %v147, -9.2103405
    %v150 = vmax.f32 %v148, -9.2103405
    %v151 = vmin.f32 %v149, -0.000100005
    %v152 = vmin.f32 %v150, -0.000100005
    %v153 = vmax.f32 %v129, 0.0
    %v154 = vmax.f32 %v130, 0.0
    %v155 = vsub.f32 0.0, %v153
    %v156 = vsub.f32 0.0, %v154
    %v157 = vsub.f32 %v155, %v142
    %v158 = vsub.f32 %v156, %v144
    %v159 = vmax.f32 %v157, -9.2103405
    %v160 = vmax.f32 %v158, -9.2103405
    %v161 = vmin.f32 %v159, -0.000100005
    %v162 = vmin.f32 %v160, -0.000100005
    %v163 = vrcp.pop %v139
    %v164 = vmul.f32 %v139, %v163
    %v165 = vsub.f32 1.0, %v164
    %v166 = vmul.f32 %v163, %v165
    %v167 = vadd.f32 %v163, %v166
    %vm168 = vweird.f32 %v139
    %vm169 = vweird.f32 %v163
    %vm170 = vmor %vm168, %vm169
    %v171 = vsel %vm170, %v163, %v167
    %v172 = vand.u32 2147483647, %v139
    %vm173 = vcmp.eq.f32.partialorder %v172, 8.507059e+37
    %v174 = vand.u32 %v139, 2147483648
    %v175 = vor.u32 1.1754944e-38, %v174
    %v176 = vsel %vm173, %v175, %v171
    %v177 = vmul.f32 1.0, %v176
    %v178 = vrcp.pop %v140
    %v179 = vmul.f32 %v140, %v178
    %v180 = vsub.f32 1.0, %v179
    %v181 = vmul.f32 %v178, %v180
    %v182 = vadd.f32 %v178, %v181
    %vm183 = vweird.f32 %v140
    %vm184 = vweird.f32 %v178
    %vm185 = vmor %vm183, %vm184
    %v186 = vsel %vm185, %v178, %v182
    %v187 = vand.u32 2147483647, %v140
    %vm188 = vcmp.eq.f32.partialorder %v187, 8.507059e+37
    %v189 = vand.u32 %v140, 2147483648
    %v190 = vor.u32 1.1754944e-38, %v189
    %v191 = vsel %vm188, %v190, %v186
    %v192 = vmul.f32 1.0, %v191
    %vm193 = vcmp.ge.f32.partialorder %v129, 0.0
    %vm194 = vcmp.ge.f32.partialorder %v130, 0.0
    %v195 = vmul.f32 %v136, %v177
    %v196 = vmul.f32 %v138, %v192
    %v197 = vsel %vm193, %v177, %v195
    %v198 = vsel %vm194, %v192, %v196
    %v199 = vmax.f32 %v197, 0.0001
    %v200 = vmax.f32 %v198, 0.0001
    %v201 = vmin.f32 %v199, 0.9999
    %v202 = vmin.f32 %v200, 0.9999
    %v203 = vsub.f32 1.0, %v201
    %v204 = vsub.f32 1.0, %v202
    %v205 = vmul.f32 %v203, %v203
    %v206 = vmul.f32 %v204, %v204
    %v207 = vmul.f32 %v151, %v205
    %v208 = vmul.f32 %v152, %v206
    %v209 = vsel %vm104, %v207, 0.0
    %v210 = vsel %vm105, %v208, 0.0
    %v211 = vmul.f32 %v201, %v201
    %v212 = vmul.f32 %v202, %v202
    %v213 = vmul.f32 %v161, %v211
    %v214 = vmul.f32 %v162, %v212
    %v215 = vmul.f32 %v213, %v110
    %v216 = vmul.f32 %v214, %v111
    %v217 = vsel %vm104, 0.0, %v215
    %v218 = vsel %vm105, 0.0, %v216
    %v219 = vsel %vm116, %v209, 0.0
    %v220 = vsel %vm116, %v210, 0.0
    %v221 = vadd.f32 %v219, %v220
    %222 = vadd.xlane.f32.xlu0 %v221
    %v223 = vpop.xlane.xlu0 %222
    %v224 = vrot.slane %v223, 4
    %v225 = vadd.f32 %v223, %v224
    %v226 = vrot.slane %v225, 2
    %v227 = vadd.f32 %v225, %v226
    %v228 = vrot.slane %v227, 1
    %v229 = vadd.f32 %v227, %v228
    %s230 = vtos %v229
    %v231 = vsel %vm116, %v217, 0.0
    %v232 = vsel %vm116, %v218, 0.0
    %v233 = vadd.f32 %v231, %v232
    %234 = vadd.xlane.f32.xlu0 %v233
    %v235 = vpop.xlane.xlu0 %234
    %v236 = vrot.slane %v235, 4
    %v237 = vadd.f32 %v235, %v236
    %v238 = vrot.slane %v237, 2
    %v239 = vadd.f32 %v237, %v238
    %v240 = vrot.slane %v239, 1
    %v241 = vadd.f32 %v239, %v240
    %s242 = vtos %v241
    %vm243 = vcmp.eq.s32.totalorder %v99, 0
    %vm244 = vcmp.eq.s32.totalorder %v101, 0
    %vm245 = vmand %vm243, %vm244
    %v246 = vstv %s230
    %v247 = vsel %vm245, %v246, 0.0
    %v248 = vadd.f32 %v247, 0.0
    %vm249 = vcmp.eq.s32.totalorder %v101, 1
    %vm250 = vmand %vm243, %vm249
    %v251 = vstv %s242
    %v252 = vsel %vm250, %v251, 0.0
    %v253 = vadd.f32 %v248, %v252
    %vm254 = vcmp.eq.s32.totalorder %v101, 2
    %vm255 = vmand %vm243, %vm254
    %v256 = vstv %s128
    %v257 = vsel %vm255, %v256, 0.0
    %v258 = vadd.f32 %v253, %v257
    %v259 = vld [vmem:[#allocation4] sm:$0x3]
    %v260 = vld [vmem:[#allocation4 + $0x6] sm:$0x3]
    %v261 = vand.u32 2147483647, %v259
    %v262 = vand.u32 2147483647, %v260
    %v263 = vsub.f32 0.0, %v261
    %v264 = vsub.f32 0.0, %v262
    %v265 = vmul.f32 %v263, 1.442695
    %v266 = vpow.pop %v265
    %v267 = vmul.f32 %v264, 1.442695
    %v268 = vpow.pop %v267
    %v269 = vadd.f32 %v266, 1.0
    %v270 = vadd.f32 %v268, 1.0
    %v271 = vlog2.pop %v269
    %v272 = vmul.f32 %v271, 0.6931472
    %v273 = vlog2.pop %v270
    %v274 = vmul.f32 %v273, 0.6931472
    %v275 = vmin.f32 %v259, 0.0
    %v276 = vmin.f32 %v260, 0.0
    %v277 = vsub.f32 %v275, %v272
    %v278 = vsub.f32 %v276, %v274
    %v279 = vmax.f32 %v277, -9.2103405
    %v280 = vmax.f32 %v278, -9.2103405
    %v281 = vmin.f32 %v279, -0.000100005
    %v282 = vmin.f32 %v280, -0.000100005
    %v283 = vmax.f32 %v259, 0.0
    %v284 = vmax.f32 %v260, 0.0
    %v285 = vsub.f32 0.0, %v283
    %v286 = vsub.f32 0.0, %v284
    %v287 = vsub.f32 %v285, %v272
    %v288 = vsub.f32 %v286, %v274
    %v289 = vmax.f32 %v287, -9.2103405
    %v290 = vmax.f32 %v288, -9.2103405
    %v291 = vmin.f32 %v289, -0.000100005
    %v292 = vmin.f32 %v290, -0.000100005
    %v293 = vrcp.pop %v269
    %v294 = vmul.f32 %v269, %v293
    %v295 = vsub.f32 1.0, %v294
    %v296 = vmul.f32 %v293, %v295
    %v297 = vadd.f32 %v293, %v296
    %vm298 = vweird.f32 %v269
    %vm299 = vweird.f32 %v293
    %vm300 = vmor %vm298, %vm299
    %v301 = vsel %vm300, %v293, %v297
    %v302 = vand.u32 2147483647, %v269
    %vm303 = vcmp.eq.f32.partialorder %v302, 8.507059e+37
    %v304 = vand.u32 %v269, 2147483648
    %v305 = vor.u32 1.1754944e-38, %v304
    %v306 = vsel %vm303, %v305, %v301
    %v307 = vmul.f32 1.0, %v306
    %v308 = vrcp.pop %v270
    %v309 = vmul.f32 %v270, %v308
    %v310 = vsub.f32 1.0, %v309
    %v311 = vmul.f32 %v308, %v310
    %v312 = vadd.f32 %v308, %v311
    %vm313 = vweird.f32 %v270
    %vm314 = vweird.f32 %v308
    %vm315 = vmor %vm313, %vm314
    %v316 = vsel %vm315, %v308, %v312
    %v317 = vand.u32 2147483647, %v270
    %vm318 = vcmp.eq.f32.partialorder %v317, 8.507059e+37
    %v319 = vand.u32 %v270, 2147483648
    %v320 = vor.u32 1.1754944e-38, %v319
    %v321 = vsel %vm318, %v320, %v316
    %v322 = vmul.f32 1.0, %v321
    %vm323 = vcmp.ge.f32.partialorder %v259, 0.0
    %vm324 = vcmp.ge.f32.partialorder %v260, 0.0
    %v325 = vmul.f32 %v266, %v307
    %v326 = vmul.f32 %v268, %v322
    %v327 = vsel %vm323, %v307, %v325
    %v328 = vsel %vm324, %v322, %v326
    %v329 = vmax.f32 %v327, 0.0001
    %v330 = vmax.f32 %v328, 0.0001
    %v331 = vmin.f32 %v329, 0.9999
    %v332 = vmin.f32 %v330, 0.9999
    %v333 = vsub.f32 1.0, %v331
    %v334 = vsub.f32 1.0, %v332
    %v335 = vmul.f32 %v333, %v333
    %v336 = vmul.f32 %v334, %v334
    %v337 = vmul.f32 %v281, %v335
    %v338 = vmul.f32 %v282, %v336
    %v339 = vsel %vm104, %v337, 0.0
    %v340 = vsel %vm105, %v338, 0.0
    %v341 = vmul.f32 %v331, %v331
    %v342 = vmul.f32 %v332, %v332
    %v343 = vmul.f32 %v291, %v341
    %v344 = vmul.f32 %v292, %v342
    %v345 = vmul.f32 %v343, %v110
    %v346 = vmul.f32 %v344, %v111
    %v347 = vsel %vm104, 0.0, %v345
    %v348 = vsel %vm105, 0.0, %v346
    %v349 = vsel %vm116, %v339, 0.0
    %v350 = vsel %vm116, %v340, 0.0
    %v351 = vadd.f32 %v349, %v350
    %352 = vadd.xlane.f32.xlu0 %v351
    %v353 = vpop.xlane.xlu0 %352
    %v354 = vrot.slane %v353, 4
    %v355 = vadd.f32 %v353, %v354
    %v356 = vrot.slane %v355, 2
    %v357 = vadd.f32 %v355, %v356
    %v358 = vrot.slane %v357, 1
    %v359 = vadd.f32 %v357, %v358
    %s360 = vtos %v359
    %v361 = vsel %vm116, %v347, 0.0
    %v362 = vsel %vm116, %v348, 0.0
    %v363 = vadd.f32 %v361, %v362
    %364 = vadd.xlane.f32.xlu0 %v363
    %v365 = vpop.xlane.xlu0 %364
    %v366 = vrot.slane %v365, 4
    %v367 = vadd.f32 %v365, %v366
    %v368 = vrot.slane %v367, 2
    %v369 = vadd.f32 %v367, %v368
    %v370 = vrot.slane %v369, 1
    %v371 = vadd.f32 %v369, %v370
    %s372 = vtos %v371
    %vm373 = vcmp.eq.s32.totalorder %v99, 3
    %vm374 = vmand %vm373, %vm244
    %v375 = vstv %s360
    %v376 = vsel %vm374, %v375, 0.0
    %v377 = vadd.f32 %v258, %v376
    %vm378 = vmand %vm373, %vm249
    %v379 = vstv %s372
    %v380 = vsel %vm378, %v379, 0.0
    %v381 = vadd.f32 %v377, %v380
    %vm382 = vmand %vm373, %vm254
    %v383 = vsel %vm382, %v256, 0.0
    %v384 = vadd.f32 %v381, %v383
    %v385 = vld [vmem:[#allocation7] sm:$0x3]
    %v386 = vld [vmem:[#allocation7 + $0x2] sm:$0x3]
    %vm387 = vcmp.eq.f32.partialorder %v385, 1.0
    %vm388 = vcmp.eq.f32.partialorder %v386, 1.0
    %v389 = vsub.f32 1.0, %v385
    %v390 = vsub.f32 1.0, %v386
    %v391 = vmul.f32 %v389, %v389
    %v392 = vmul.f32 %v390, %v390
    %v393 = vmul.f32 %v391, %v391
    %v394 = vmul.f32 %v392, %v392
    %v395 = vsel %vm387, 1, 0
    %v396 = vsel %vm388, 1, 0
    %v397 = vcvt.s32.f32 %v395
    %v398 = vcvt.s32.f32 %v396
    %v399 = vsel %vm116, %v397, 0.0
    %v400 = vsel %vm116, %v398, 0.0
    %v401 = vadd.f32 %v399, %v400
    %402 = vadd.xlane.f32.xlu0 %v401
    %v403 = vpop.xlane.xlu0 %402
    %v404 = vrot.slane %v403, 4
    %v405 = vadd.f32 %v403, %v404
    %v406 = vrot.slane %v405, 2
    %v407 = vadd.f32 %v405, %v406
    %v408 = vrot.slane %v407, 1
    %v409 = vadd.f32 %v407, %v408
    %s410 = vtos %v409
    %s411 = scalar_lea.vmem [#allocation2], 2
    %v412 = vld [vmem:[%s411] sm:$0x3]
    %v413 = vld [vmem:[%s411 + $0x6] sm:$0x3]
    %v414 = vand.u32 2147483647, %v412
    %v415 = vand.u32 2147483647, %v413
    %v416 = vsub.f32 0.0, %v414
    %v417 = vsub.f32 0.0, %v415
    %v418 = vmul.f32 %v416, 1.442695
    %v419 = vpow.pop %v418
    %v420 = vmul.f32 %v417, 1.442695
    %v421 = vpow.pop %v420
    %v422 = vadd.f32 %v419, 1.0
    %v423 = vadd.f32 %v421, 1.0
    %v424 = vlog2.pop %v422
    %v425 = vmul.f32 %v424, 0.6931472
    %v426 = vlog2.pop %v423
    %v427 = vmul.f32 %v426, 0.6931472
    %v428 = vmin.f32 %v412, 0.0
    %v429 = vmin.f32 %v413, 0.0
    %v430 = vsub.f32 %v428, %v425
    %v431 = vsub.f32 %v429, %v427
    %v432 = vmax.f32 %v430, -9.2103405
    %v433 = vmax.f32 %v431, -9.2103405
    %v434 = vmin.f32 %v432, -0.000100005
    %v435 = vmin.f32 %v433, -0.000100005
    %v436 = vmax.f32 %v412, 0.0
    %v437 = vmax.f32 %v413, 0.0
    %v438 = vsub.f32 0.0, %v436
    %v439 = vsub.f32 0.0, %v437
    %v440 = vsub.f32 %v438, %v425
    %v441 = vsub.f32 %v439, %v427
    %v442 = vmax.f32 %v440, -9.2103405
    %v443 = vmax.f32 %v441, -9.2103405
    %v444 = vmin.f32 %v442, -0.000100005
    %v445 = vmin.f32 %v443, -0.000100005
    %v446 = vrcp.pop %v422
    %v447 = vmul.f32 %v422, %v446
    %v448 = vsub.f32 1.0, %v447
    %v449 = vmul.f32 %v446, %v448
    %v450 = vadd.f32 %v446, %v449
    %vm451 = vweird.f32 %v422
    %vm452 = vweird.f32 %v446
    %vm453 = vmor %vm451, %vm452
    %v454 = vsel %vm453, %v446, %v450
    %v455 = vand.u32 2147483647, %v422
    %vm456 = vcmp.eq.f32.partialorder %v455, 8.507059e+37
    %v457 = vand.u32 %v422, 2147483648
    %v458 = vor.u32 1.1754944e-38, %v457
    %v459 = vsel %vm456, %v458, %v454
    %v460 = vmul.f32 1.0, %v459
    %v461 = vrcp.pop %v423
    %v462 = vmul.f32 %v423, %v461
    %v463 = vsub.f32 1.0, %v462
    %v464 = vmul.f32 %v461, %v463
    %v465 = vadd.f32 %v461, %v464
    %vm466 = vweird.f32 %v423
    %vm467 = vweird.f32 %v461
    %vm468 = vmor %vm466, %vm467
    %v469 = vsel %vm468, %v461, %v465
    %v470 = vand.u32 2147483647, %v423
    %vm471 = vcmp.eq.f32.partialorder %v470, 8.507059e+37
    %v472 = vand.u32 %v423, 2147483648
    %v473 = vor.u32 1.1754944e-38, %v472
    %v474 = vsel %vm471, %v473, %v469
    %v475 = vmul.f32 1.0, %v474
    %vm476 = vcmp.ge.f32.partialorder %v412, 0.0
    %vm477 = vcmp.ge.f32.partialorder %v413, 0.0
    %v478 = vmul.f32 %v419, %v460
    %v479 = vmul.f32 %v421, %v475
    %v480 = vsel %vm476, %v460, %v478
    %v481 = vsel %vm477, %v475, %v479
    %v482 = vmax.f32 %v480, 0.0001
    %v483 = vmax.f32 %v481, 0.0001
    %v484 = vmin.f32 %v482, 0.9999
    %v485 = vmin.f32 %v483, 0.9999
    %v486 = vsub.f32 1.0, %v484
    %v487 = vsub.f32 1.0, %v485
    %v488 = vmul.f32 %v486, %v486
    %v489 = vmul.f32 %v487, %v487
    %v490 = vmul.f32 %v434, %v488
    %v491 = vmul.f32 %v435, %v489
    %v492 = vsel %vm387, %v490, 0.0
    %v493 = vsel %vm388, %v491, 0.0
    %v494 = vmul.f32 %v484, %v484
    %v495 = vmul.f32 %v485, %v485
    %v496 = vmul.f32 %v444, %v494
    %v497 = vmul.f32 %v445, %v495
    %v498 = vmul.f32 %v496, %v393
    %v499 = vmul.f32 %v497, %v394
    %v500 = vsel %vm387, 0.0, %v498
    %v501 = vsel %vm388, 0.0, %v499
    %v502 = vsel %vm116, %v492, 0.0
    %v503 = vsel %vm116, %v493, 0.0
    %v504 = vadd.f32 %v502, %v503
    %505 = vadd.xlane.f32.xlu0 %v504
    %v506 = vpop.xlane.xlu0 %505
    %v507 = vrot.slane %v506, 4
    %v508 = vadd.f32 %v506, %v507
    %v509 = vrot.slane %v508, 2
    %v510 = vadd.f32 %v508, %v509
    %v511 = vrot.slane %v510, 1
    %v512 = vadd.f32 %v510, %v511
    %s513 = vtos %v512
    %v514 = vsel %vm116, %v500, 0.0
    %v515 = vsel %vm116, %v501, 0.0
    %v516 = vadd.f32 %v514, %v515
    %517 = vadd.xlane.f32.xlu0 %v516
    %v518 = vpop.xlane.xlu0 %517
    %v519 = vrot.slane %v518, 4
    %v520 = vadd.f32 %v518, %v519
    %v521 = vrot.slane %v520, 2
    %v522 = vadd.f32 %v520, %v521
    %v523 = vrot.slane %v522, 1
    %v524 = vadd.f32 %v522, %v523
    %s525 = vtos %v524
    %vm526 = vcmp.eq.s32.totalorder %v99, 1
    %vm527 = vmand %vm526, %vm244
    %v528 = vstv %s513
    %v529 = vsel %vm527, %v528, 0.0
    %v530 = vadd.f32 %v384, %v529
    %vm531 = vmand %vm526, %vm249
    %v532 = vstv %s525
    %v533 = vsel %vm531, %v532, 0.0
    %v534 = vadd.f32 %v530, %v533
    %vm535 = vmand %vm526, %vm254
    %v536 = vstv %s410
    %v537 = vsel %vm535, %v536, 0.0
    %v538 = vadd.f32 %v534, %v537
    %s539 = scalar_lea.vmem [#allocation4], 2
    %v540 = vld [vmem:[%s539] sm:$0x3]
    %v541 = vld [vmem:[%s539 + $0x6] sm:$0x3]
    %v542 = vand.u32 2147483647, %v540
    %v543 = vand.u32 2147483647, %v541
    %v544 = vsub.f32 0.0, %v542
    %v545 = vsub.f32 0.0, %v543
    %v546 = vmul.f32 %v544, 1.442695
    %v547 = vpow.pop %v546
    %v548 = vmul.f32 %v545, 1.442695
    %v549 = vpow.pop %v548
    %v550 = vadd.f32 %v547, 1.0
    %v551 = vadd.f32 %v549, 1.0
    %v552 = vlog2.pop %v550
    %v553 = vmul.f32 %v552, 0.6931472
    %v554 = vlog2.pop %v551
    %v555 = vmul.f32 %v554, 0.6931472
    %v556 = vmin.f32 %v540, 0.0
    %v557 = vmin.f32 %v541, 0.0
    %v558 = vsub.f32 %v556, %v553
    %v559 = vsub.f32 %v557, %v555
    %v560 = vmax.f32 %v558, -9.2103405
    %v561 = vmax.f32 %v559, -9.2103405
    %v562 = vmin.f32 %v560, -0.000100005
    %v563 = vmin.f32 %v561, -0.000100005
    %v564 = vmax.f32 %v540, 0.0
    %v565 = vmax.f32 %v541, 0.0
    %v566 = vsub.f32 0.0, %v564
    %v567 = vsub.f32 0.0, %v565
    %v568 = vsub.f32 %v566, %v553
    %v569 = vsub.f32 %v567, %v555
    %v570 = vmax.f32 %v568, -9.2103405
    %v571 = vmax.f32 %v569, -9.2103405
    %v572 = vmin.f32 %v570, -0.000100005
    %v573 = vmin.f32 %v571, -0.000100005
    %v574 = vrcp.pop %v550
    %v575 = vmul.f32 %v550, %v574
    %v576 = vsub.f32 1.0, %v575
    %v577 = vmul.f32 %v574, %v576
    %v578 = vadd.f32 %v574, %v577
    %vm579 = vweird.f32 %v550
    %vm580 = vweird.f32 %v574
    %vm581 = vmor %vm579, %vm580
    %v582 = vsel %vm581, %v574, %v578
    %v583 = vand.u32 2147483647, %v550
    %vm584 = vcmp.eq.f32.partialorder %v583, 8.507059e+37
    %v585 = vand.u32 %v550, 2147483648
    %v586 = vor.u32 1.1754944e-38, %v585
    %v587 = vsel %vm584, %v586, %v582
    %v588 = vmul.f32 1.0, %v587
    %v589 = vrcp.pop %v551
    %v590 = vmul.f32 %v551, %v589
    %v591 = vsub.f32 1.0, %v590
    %v592 = vmul.f32 %v589, %v591
    %v593 = vadd.f32 %v589, %v592
    %vm594 = vweird.f32 %v551
    %vm595 = vweird.f32 %v589
    %vm596 = vmor %vm594, %vm595
    %v597 = vsel %vm596, %v589, %v593
    %v598 = vand.u32 2147483647, %v551
    %vm599 = vcmp.eq.f32.partialorder %v598, 8.507059e+37
    %v600 = vand.u32 %v551, 2147483648
    %v601 = vor.u32 1.1754944e-38, %v600
    %v602 = vsel %vm599, %v601, %v597
    %v603 = vmul.f32 1.0, %v602
    %vm604 = vcmp.ge.f32.partialorder %v540, 0.0
    %vm605 = vcmp.ge.f32.partialorder %v541, 0.0
    %v606 = vmul.f32 %v547, %v588
    %v607 = vmul.f32 %v549, %v603
    %v608 = vsel %vm604, %v588, %v606
    %v609 = vsel %vm605, %v603, %v607
    %v610 = vmax.f32 %v608, 0.0001
    %v611 = vmax.f32 %v609, 0.0001
    %v612 = vmin.f32 %v610, 0.9999
    %v613 = vmin.f32 %v611, 0.9999
    %v614 = vsub.f32 1.0, %v612
    %v615 = vsub.f32 1.0, %v613
    %v616 = vmul.f32 %v614, %v614
    %v617 = vmul.f32 %v615, %v615
    %v618 = vmul.f32 %v562, %v616
    %v619 = vmul.f32 %v563, %v617
    %v620 = vsel %vm387, %v618, 0.0
    %v621 = vsel %vm388, %v619, 0.0
    %v622 = vmul.f32 %v612, %v612
    %v623 = vmul.f32 %v613, %v613
    %v624 = vmul.f32 %v572, %v622
    %v625 = vmul.f32 %v573, %v623
    %v626 = vmul.f32 %v624, %v393
    %v627 = vmul.f32 %v625, %v394
    %v628 = vsel %vm387, 0.0, %v626
    %v629 = vsel %vm388, 0.0, %v627
    %v630 = vsel %vm116, %v620, 0.0
    %v631 = vsel %vm116, %v621, 0.0
    %v632 = vadd.f32 %v630, %v631
    %633 = vadd.xlane.f32.xlu0 %v632
    %v634 = vpop.xlane.xlu0 %633
    %v635 = vrot.slane %v634, 4
    %v636 = vadd.f32 %v634, %v635
    %v637 = vrot.slane %v636, 2
    %v638 = vadd.f32 %v636, %v637
    %v639 = vrot.slane %v638, 1
    %v640 = vadd.f32 %v638, %v639
    %s641 = vtos %v640
    %v642 = vsel %vm116, %v628, 0.0
    %v643 = vsel %vm116, %v629, 0.0
    %v644 = vadd.f32 %v642, %v643
    %645 = vadd.xlane.f32.xlu0 %v644
    %v646 = vpop.xlane.xlu0 %645
    %v647 = vrot.slane %v646, 4
    %v648 = vadd.f32 %v646, %v647
    %v649 = vrot.slane %v648, 2
    %v650 = vadd.f32 %v648, %v649
    %v651 = vrot.slane %v650, 1
    %v652 = vadd.f32 %v650, %v651
    %s653 = vtos %v652
    %vm654 = vcmp.eq.s32.totalorder %v99, 4
    %vm655 = vmand %vm654, %vm244
    %v656 = vstv %s641
    %v657 = vsel %vm655, %v656, 0.0
    %v658 = vadd.f32 %v538, %v657
    %vm659 = vmand %vm654, %vm249
    %v660 = vstv %s653
    %v661 = vsel %vm659, %v660, 0.0
    %v662 = vadd.f32 %v658, %v661
    %vm663 = vmand %vm654, %vm254
    %v664 = vsel %vm663, %v536, 0.0
    %v665 = vadd.f32 %v662, %v664
    %v666 = vld [vmem:[#allocation9] sm:$0x3]
    %v667 = vld [vmem:[#allocation9 + $0x2] sm:$0x3]
    %vm668 = vcmp.eq.f32.partialorder %v666, 1.0
    %vm669 = vcmp.eq.f32.partialorder %v667, 1.0
    %v670 = vsub.f32 1.0, %v666
    %v671 = vsub.f32 1.0, %v667
    %v672 = vmul.f32 %v670, %v670
    %v673 = vmul.f32 %v671, %v671
    %v674 = vmul.f32 %v672, %v672
    %v675 = vmul.f32 %v673, %v673
    %v676 = vsel %vm668, 1, 0
    %v677 = vsel %vm669, 1, 0
    %v678 = vcvt.s32.f32 %v676
    %v679 = vcvt.s32.f32 %v677
    %v680 = vsel %vm116, %v678, 0.0
    %v681 = vsel %vm116, %v679, 0.0
    %v682 = vadd.f32 %v680, %v681
    %683 = vadd.xlane.f32.xlu0 %v682
    %v684 = vpop.xlane.xlu0 %683
    %v685 = vrot.slane %v684, 4
    %v686 = vadd.f32 %v684, %v685
    %v687 = vrot.slane %v686, 2
    %v688 = vadd.f32 %v686, %v687
    %v689 = vrot.slane %v688, 1
    %v690 = vadd.f32 %v688, %v689
    %s691 = vtos %v690
    %s692 = scalar_lea.vmem [#allocation2], 4
    %v693 = vld [vmem:[%s692] sm:$0x3]
    %v694 = vld [vmem:[%s692 + $0x6] sm:$0x3]
    %v695 = vand.u32 2147483647, %v693
    %v696 = vand.u32 2147483647, %v694
    %v697 = vsub.f32 0.0, %v695
    %v698 = vsub.f32 0.0, %v696
    %v699 = vmul.f32 %v697, 1.442695
    %v700 = vpow.pop %v699
    %v701 = vmul.f32 %v698, 1.442695
    %v702 = vpow.pop %v701
    %v703 = vadd.f32 %v700, 1.0
    %v704 = vadd.f32 %v702, 1.0
    %v705 = vlog2.pop %v703
    %v706 = vmul.f32 %v705, 0.6931472
    %v707 = vlog2.pop %v704
    %v708 = vmul.f32 %v707, 0.6931472
    %v709 = vmin.f32 %v693, 0.0
    %v710 = vmin.f32 %v694, 0.0
    %v711 = vsub.f32 %v709, %v706
    %v712 = vsub.f32 %v710, %v708
    %v713 = vmax.f32 %v711, -9.2103405
    %v714 = vmax.f32 %v712, -9.2103405
    %v715 = vmin.f32 %v713, -0.000100005
    %v716 = vmin.f32 %v714, -0.000100005
    %v717 = vmax.f32 %v693, 0.0
    %v718 = vmax.f32 %v694, 0.0
    %v719 = vsub.f32 0.0, %v717
    %v720 = vsub.f32 0.0, %v718
    %v721 = vsub.f32 %v719, %v706
    %v722 = vsub.f32 %v720, %v708
    %v723 = vmax.f32 %v721, -9.2103405
    %v724 = vmax.f32 %v722, -9.2103405
    %v725 = vmin.f32 %v723, -0.000100005
    %v726 = vmin.f32 %v724, -0.000100005
    %v727 = vrcp.pop %v703
    %v728 = vmul.f32 %v703, %v727
    %v729 = vsub.f32 1.0, %v728
    %v730 = vmul.f32 %v727, %v729
    %v731 = vadd.f32 %v727, %v730
    %vm732 = vweird.f32 %v703
    %vm733 = vweird.f32 %v727
    %vm734 = vmor %vm732, %vm733
    %v735 = vsel %vm734, %v727, %v731
    %v736 = vand.u32 2147483647, %v703
    %vm737 = vcmp.eq.f32.partialorder %v736, 8.507059e+37
    %v738 = vand.u32 %v703, 2147483648
    %v739 = vor.u32 1.1754944e-38, %v738
    %v740 = vsel %vm737, %v739, %v735
    %v741 = vmul.f32 1.0, %v740
    %v742 = vrcp.pop %v704
    %v743 = vmul.f32 %v704, %v742
    %v744 = vsub.f32 1.0, %v743
    %v745 = vmul.f32 %v742, %v744
    %v746 = vadd.f32 %v742, %v745
    %vm747 = vweird.f32 %v704
    %vm748 = vweird.f32 %v742
    %vm749 = vmor %vm747, %vm748
    %v750 = vsel %vm749, %v742, %v746
    %v751 = vand.u32 2147483647, %v704
    %vm752 = vcmp.eq.f32.partialorder %v751, 8.507059e+37
    %v753 = vand.u32 %v704, 2147483648
    %v754 = vor.u32 1.1754944e-38, %v753
    %v755 = vsel %vm752, %v754, %v750
    %v756 = vmul.f32 1.0, %v755
    %vm757 = vcmp.ge.f32.partialorder %v693, 0.0
    %vm758 = vcmp.ge.f32.partialorder %v694, 0.0
    %v759 = vmul.f32 %v700, %v741
    %v760 = vmul.f32 %v702, %v756
    %v761 = vsel %vm757, %v741, %v759
    %v762 = vsel %vm758, %v756, %v760
    %v763 = vmax.f32 %v761, 0.0001
    %v764 = vmax.f32 %v762, 0.0001
    %v765 = vmin.f32 %v763, 0.9999
    %v766 = vmin.f32 %v764, 0.9999
    %v767 = vsub.f32 1.0, %v765
    %v768 = vsub.f32 1.0, %v766
    %v769 = vmul.f32 %v767, %v767
    %v770 = vmul.f32 %v768, %v768
    %v771 = vmul.f32 %v715, %v769
    %v772 = vmul.f32 %v716, %v770
    %v773 = vsel %vm668, %v771, 0.0
    %v774 = vsel %vm669, %v772, 0.0
    %v775 = vmul.f32 %v765, %v765
    %v776 = vmul.f32 %v766, %v766
    %v777 = vmul.f32 %v725, %v775
    %v778 = vmul.f32 %v726, %v776
    %v779 = vmul.f32 %v777, %v674
    %v780 = vmul.f32 %v778, %v675
    %v781 = vsel %vm668, 0.0, %v779
    %v782 = vsel %vm669, 0.0, %v780
    %v783 = vsel %vm116, %v773, 0.0
    %v784 = vsel %vm116, %v774, 0.0
    %v785 = vadd.f32 %v783, %v784
    %786 = vadd.xlane.f32.xlu0 %v785
    %v787 = vpop.xlane.xlu0 %786
    %v788 = vrot.slane %v787, 4
    %v789 = vadd.f32 %v787, %v788
    %v790 = vrot.slane %v789, 2
    %v791 = vadd.f32 %v789, %v790
    %v792 = vrot.slane %v791, 1
    %v793 = vadd.f32 %v791, %v792
    %s794 = vtos %v793
    %v795 = vsel %vm116, %v781, 0.0
    %v796 = vsel %vm116, %v782, 0.0
    %v797 = vadd.f32 %v795, %v796
    %798 = vadd.xlane.f32.xlu0 %v797
    %v799 = vpop.xlane.xlu0 %798
    %v800 = vrot.slane %v799, 4
    %v801 = vadd.f32 %v799, %v800
    %v802 = vrot.slane %v801, 2
    %v803 = vadd.f32 %v801, %v802
    %v804 = vrot.slane %v803, 1
    %v805 = vadd.f32 %v803, %v804
    %s806 = vtos %v805
    %vm807 = vcmp.eq.s32.totalorder %v99, 2
    %vm808 = vmand %vm807, %vm244
    %v809 = vstv %s794
    %v810 = vsel %vm808, %v809, 0.0
    %v811 = vadd.f32 %v665, %v810
    %vm812 = vmand %vm807, %vm249
    %v813 = vstv %s806
    %v814 = vsel %vm812, %v813, 0.0
    %v815 = vadd.f32 %v811, %v814
    %vm816 = vmand %vm807, %vm254
    %v817 = vstv %s691
    %v818 = vsel %vm816, %v817, 0.0
    %v819 = vadd.f32 %v815, %v818
    %s820 = scalar_lea.vmem [#allocation4], 4
    %v821 = vld [vmem:[%s820] sm:$0x3]
    %v822 = vld [vmem:[%s820 + $0x6] sm:$0x3]
    %v823 = vand.u32 2147483647, %v821
    %v824 = vand.u32 2147483647, %v822
    %v825 = vsub.f32 0.0, %v823
    %v826 = vsub.f32 0.0, %v824
    %v827 = vmul.f32 %v825, 1.442695
    %v828 = vpow.pop %v827
    %v829 = vmul.f32 %v826, 1.442695
    %v830 = vpow.pop %v829
    %v831 = vadd.f32 %v828, 1.0
    %v832 = vadd.f32 %v830, 1.0
    %v833 = vlog2.pop %v831
    %v834 = vmul.f32 %v833, 0.6931472
    %v835 = vlog2.pop %v832
    %v836 = vmul.f32 %v835, 0.6931472
    %v837 = vmin.f32 %v821, 0.0
    %v838 = vmin.f32 %v822, 0.0
    %v839 = vsub.f32 %v837, %v834
    %v840 = vsub.f32 %v838, %v836
    %v841 = vmax.f32 %v839, -9.2103405
    %v842 = vmax.f32 %v840, -9.2103405
    %v843 = vmin.f32 %v841, -0.000100005
    %v844 = vmin.f32 %v842, -0.000100005
    %v845 = vmax.f32 %v821, 0.0
    %v846 = vmax.f32 %v822, 0.0
    %v847 = vsub.f32 0.0, %v845
    %v848 = vsub.f32 0.0, %v846
    %v849 = vsub.f32 %v847, %v834
    %v850 = vsub.f32 %v848, %v836
    %v851 = vmax.f32 %v849, -9.2103405
    %v852 = vmax.f32 %v850, -9.2103405
    %v853 = vmin.f32 %v851, -0.000100005
    %v854 = vmin.f32 %v852, -0.000100005
    %v855 = vrcp.pop %v831
    %v856 = vmul.f32 %v831, %v855
    %v857 = vsub.f32 1.0, %v856
    %v858 = vmul.f32 %v855, %v857
    %v859 = vadd.f32 %v855, %v858
    %vm860 = vweird.f32 %v831
    %vm861 = vweird.f32 %v855
    %vm862 = vmor %vm860, %vm861
    %v863 = vsel %vm862, %v855, %v859
    %v864 = vand.u32 2147483647, %v831
    %vm865 = vcmp.eq.f32.partialorder %v864, 8.507059e+37
    %v866 = vand.u32 %v831, 2147483648
    %v867 = vor.u32 1.1754944e-38, %v866
    %v868 = vsel %vm865, %v867, %v863
    %v869 = vmul.f32 1.0, %v868
    %v870 = vrcp.pop %v832
    %v871 = vmul.f32 %v832, %v870
    %v872 = vsub.f32 1.0, %v871
    %v873 = vmul.f32 %v870, %v872
    %v874 = vadd.f32 %v870, %v873
    %vm875 = vweird.f32 %v832
    %vm876 = vweird.f32 %v870
    %vm877 = vmor %vm875, %vm876
    %v878 = vsel %vm877, %v870, %v874
    %v879 = vand.u32 2147483647, %v832
    %vm880 = vcmp.eq.f32.partialorder %v879, 8.507059e+37
    %v881 = vand.u32 %v832, 2147483648
    %v882 = vor.u32 1.1754944e-38, %v881
    %v883 = vsel %vm880, %v882, %v878
    %v884 = vmul.f32 1.0, %v883
    %vm885 = vcmp.ge.f32.partialorder %v821, 0.0
    %vm886 = vcmp.ge.f32.partialorder %v822, 0.0
    %v887 = vmul.f32 %v828, %v869
    %v888 = vmul.f32 %v830, %v884
    %v889 = vsel %vm885, %v869, %v887
    %v890 = vsel %vm886, %v884, %v888
    %v891 = vmax.f32 %v889, 0.0001
    %v892 = vmax.f32 %v890, 0.0001
    %v893 = vmin.f32 %v891, 0.9999
    %v894 = vmin.f32 %v892, 0.9999
    %v895 = vsub.f32 1.0, %v893
    %v896 = vsub.f32 1.0, %v894
    %v897 = vmul.f32 %v895, %v895
    %v898 = vmul.f32 %v896, %v896
    %v899 = vmul.f32 %v843, %v897
    %v900 = vmul.f32 %v844, %v898
    %v901 = vsel %vm668, %v899, 0.0
    %v902 = vsel %vm669, %v900, 0.0
    %v903 = vmul.f32 %v893, %v893
    %v904 = vmul.f32 %v894, %v894
    %v905 = vmul.f32 %v853, %v903
    %v906 = vmul.f32 %v854, %v904
    %v907 = vmul.f32 %v905, %v674
    %v908 = vmul.f32 %v906, %v675
    %v909 = vsel %vm668, 0.0, %v907
    %v910 = vsel %vm669, 0.0, %v908
    %v911 = vsel %vm116, %v901, 0.0
    %v912 = vsel %vm116, %v902, 0.0
    %v913 = vadd.f32 %v911, %v912
    %914 = vadd.xlane.f32.xlu0 %v913
    %v915 = vpop.xlane.xlu0 %914
    %v916 = vrot.slane %v915, 4
    %v917 = vadd.f32 %v915, %v916
    %v918 = vrot.slane %v917, 2
    %v919 = vadd.f32 %v917, %v918
    %v920 = vrot.slane %v919, 1
    %v921 = vadd.f32 %v919, %v920
    %s922 = vtos %v921
    %v923 = vsel %vm116, %v909, 0.0
    %v924 = vsel %vm116, %v910, 0.0
    %v925 = vadd.f32 %v923, %v924
    %926 = vadd.xlane.f32.xlu0 %v925
    %v927 = vpop.xlane.xlu0 %926
    %v928 = vrot.slane %v927, 4
    %v929 = vadd.f32 %v927, %v928
    %v930 = vrot.slane %v929, 2
    %v931 = vadd.f32 %v929, %v930
    %v932 = vrot.slane %v931, 1
    %v933 = vadd.f32 %v931, %v932
    %s934 = vtos %v933
    %vm935 = vcmp.eq.s32.totalorder %v99, 5
    %vm936 = vmand %vm935, %vm244
    %v937 = vstv %s922
    %v938 = vsel %vm936, %v937, 0.0
    %v939 = vadd.f32 %v819, %v938
    %vm940 = vmand %vm935, %vm249
    %v941 = vstv %s934
    %v942 = vsel %vm940, %v941, 0.0
    %v943 = vadd.f32 %v939, %v942
    %vm944 = vmand %vm935, %vm254
    %v945 = vsel %vm944, %v817, 0.0
    %v946 = vadd.f32 %v943, %v945
    %947 = vst [vmem:[%s5] sm:$0x3f] %v946
    // Predicated region
    $region42: #{tpu_custom_call.1} parent=1 // pred_check
      _
    $region43: #{tpu_custom_call.1} parent=1 // pred_check_branch
      %949 = sbr.rel (0) target = $region45
    $region44: #{tpu_custom_call.1} parent=1 // pred_region
      _
    $region45: #{tpu_custom_call.1} parent=1 // pred_fallthru
      _
    // Predicated region
    $region46: #{tpu_custom_call.1} parent=1 // pred_check
      _
    $region47: #{tpu_custom_call.1} parent=1 // pred_check_branch
      %951 = sbr.rel (0) target = $region49
    $region48: #{tpu_custom_call.1} parent=1 // pred_region
      _
    $region49: #{tpu_custom_call.1} parent=1 // pred_fallthru
      _
    %952 = vsyncpa [#allocation3], 1
    %953 = vsyncpa [#allocation5], 1
    %954 = vsyncpa [#allocation8], 1

</llo_original>
